<compile_context>
chip_gen: v6e
topology: v6e:2x2x1
jax: 0.10.0
libtpu: 0.0.40
codegen_flags: <defaults>
</compile_context>

<pallas_src>
import jax
import jax.numpy as jnp
from jax.experimental import pallas as pl
from jax.experimental.pallas import tpu as pltpu

# ----------------------------- hyper-parameters ------------------------------
HIDDEN = 32                      # text_model.config.hidden_size (scaled from 768)
NHEAD = 4                        # nn.TransformerEncoderLayer(nhead=4)
HEAD_DIM = HIDDEN // NHEAD
DFF = 64                         # dim_feedforward (scaled from 2048)
NLAYERS = 2                      # nn.TransformerEncoder(num_layers=2)
VOCAB = 100
VOCAB_PAD = 104                  # VOCAB rounded up to a sublane multiple (8)
PATCH = 8
IMG_C = 3
IMG_HW = 16
PATCH_DIM = IMG_C * PATCH * PATCH            # 192
N_PATCH = (IMG_HW // PATCH) ** 2             # 4
SEQ_TEXT = 8
T_PAD = 16                       # LT + 1 + N_PATCH = 13, zero-padded to 16
N_CLS1, N_CLS2, N_CLS3 = 6, 7, 8
N_HEADS_CLS = 3
OUT_PAD = 128                    # lane-dense padded width of the fused cls output
LANE = 128
NSEL = 8                         # head-selector width (>= NHEAD, sublane friendly)
LN_EPS = 1e-5

# ----------------------- bf16 weight-slab row offsets ------------------------
W_TE = 0                                         # text embedding table (VOCAB_PAD rows)
W_PATCH = W_TE + VOCAB_PAD                       # patch-embed weight (PATCH_DIM rows)
W_LAYER0 = W_PATCH + PATCH_DIM                   # first encoder layer block
W_QKV, W_WO, W_W1, W_W2 = 0, HIDDEN, 2 * HIDDEN, 3 * HIDDEN   # offsets inside a layer
W_PER_LAYER = 3 * HIDDEN + DFF                   # 160 rows per layer
W_HEAD1 = W_LAYER0 + NLAYERS * W_PER_LAYER       # fused cls first Linear (H rows)
W_HEAD2 = W_HEAD1 + HIDDEN                       # block-diag cls final Linear (3H rows)
W_MSEL = W_HEAD2 + N_HEADS_CLS * HIDDEN          # head-selector (H rows)
W_MSELT = W_MSEL + HIDDEN                        # head-selector transposed (NSEL rows)
W_ROWS = W_MSELT + NSEL                          # 784 rows total

# ------------------------ f32 bias/LN-slab row offsets ------------------------
P_PATCH_B = 0
P_IMG_CLS = 1
P_LAYER0 = 2
(P_BQKV, P_BO, P_B1, P_B2,
 P_LN1G, P_LN1B, P_LN2G, P_LN2B) = range(8)      # offsets inside a layer block
P_PER_LAYER = 8
P_HEAD_B1 = P_LAYER0 + NLAYERS * P_PER_LAYER     # 18
P_HEAD_LNG = P_HEAD_B1 + 1                       # 19 .. 21
P_HEAD_LNB = P_HEAD_LNG + N_HEADS_CLS            # 22 .. 24
P_HEAD_B2 = P_HEAD_LNB + N_HEADS_CLS             # 25
P_ROWS = 32                                      # padded to a sublane multiple


# ------------------------------- spec helpers --------------------------------
def _zero_map(ndim):
    return lambda i: (0,) * ndim


def _full_specs(arrays):
    # Each array is one full block resident in VMEM (grid=(1,)); block shape ==
    # full array shape, which is exempt from the (8,128) divisibility rule.
    return [pl.BlockSpec(a.shape, _zero_map(a.ndim)) for a in arrays]


def _layer_norm(x, g, b):
    mu = jnp.mean(x, axis=-1, keepdims=True)
    var = jnp.mean((x - mu) ** 2, axis=-1, keepdims=True)
    return (x - mu) * jax.lax.rsqrt(var + LN_EPS) * g + b


# ------------------------------- fused kernel --------------------------------
def fused_forward_kernel(idm_ref, patches_ref, w_ref, p_ref, o_ref):
    """idm_ref:     (B*LT, 2)   int32   [:,0]=input_ids  [:,1]=attention_mask
       patches_ref: (B*NP, 192) f32     flattened image patches
       w_ref:       (784, 128)  bf16    packed weight slab
       p_ref:       (32, 128)   f32     packed bias / LayerNorm slab
       o_ref:       (B, 128)    f32     fused classifier logits (lane-dense)"""
    f32, bf16 = jnp.float32, jnp.bfloat16
    H = HIDDEN
    B = patches_ref.shape[0] // N_PATCH
    LT = idm_ref.shape[0] // B
    M = B * T_PAD

    # ---- text backbone stand-in: embedding gather as one-hot @ table (MXU) ----
    ids = idm_ref[:, 0:1]                                     # (B*LT, 1) int32
    mask = idm_ref[:, 1:2].astype(bf16)                       # (B*LT, 1)
    vocab_iota = jax.lax.broadcasted_iota(jnp.int32, (1, VOCAB_PAD), 1)
    onehot = (ids == vocab_iota).astype(bf16) * mask          # (B*LT, VOCAB_PAD)
    text = jnp.dot(onehot, w_ref[W_TE:W_TE + VOCAB_PAD, :],
                   preferred_element_type=f32)[:, :H]         # (B*LT, H) f32

    # ---- image backbone stand-in: ViT-style patch embedding (one MXU matmul) ----
    patch_tok = jnp.dot(patches_ref[...].astype(bf16),
                        w_ref[W_PATCH:W_PATCH + PATCH_DIM, :],
                        preferred_element_type=f32)[:, :H]
    patch_tok = patch_tok + p_ref[P_PATCH_B:P_PATCH_B + 1, :H]        # (B*NP, H)

    img_cls = p_ref[P_IMG_CLS:P_IMG_CLS + 1, :H]                      # (1, H)

    # ---- [text | img_cls | patches | zero-pad] per batch, register concat ----
    n_zero = T_PAD - LT - 1 - N_PATCH
    pieces = []
    for b in range(B):
        pieces.append(text[b * LT:(b + 1) * LT, :])
        pieces.append(img_cls)
        pieces.append(patch_tok[b * N_PATCH:(b + 1) * N_PATCH, :])
        pieces.append(jnp.zeros((n_zero, H), f32))
    x = jnp.concatenate(pieces, axis=0)                               # (M, H) f32

    # constant 0/1 head-selector (H, NSEL) and its transpose (NSEL, H)
    msel = w_ref[W_MSEL:W_MSEL + H, :NSEL]
    mselT = w_ref[W_MSELT:W_MSELT + NSEL, :H]

    # ---- 2-layer TransformerEncoder (batch_first=False semantics) ----
    for l in range(NLAYERS):
        wb = W_LAYER0 + l * W_PER_LAYER
        pb = P_LAYER0 + l * P_PER_LAYER

        xb = x.astype(bf16)
        qkv = jnp.dot(xb, w_ref[wb + W_QKV:wb + W_QKV + H, :],
                      preferred_element_type=f32)
        qkv = qkv[:, :3 * H] + p_ref[pb + P_BQKV:pb + P_BQKV + 1, :3 * H]
        q3 = qkv[:, 0:H].reshape(B, T_PAD, H)        # scale folded into weights
        k3 = qkv[:, H:2 * H].reshape(B, T_PAD, H)
        v3 = qkv[:, 2 * H:3 * H].reshape(B, T_PAD, H)

        # Attention over dim 0 (original batch axis), independently per (token,
        # head) slot — exactly PyTorch batch_first=False fed a (B, T, H) tensor.
        # Per-head reduce / broadcast go through the (idle) MXU via the 0/1
        # selector so every intermediate stays H=32 lanes wide.
        prod = q3[:, None, :, :] * k3[None, :, :, :]                  # (B,B,T,H)
        s = jnp.dot(prod.reshape(B * B * T_PAD, H).astype(bf16), msel,
                    preferred_element_type=f32)                       # (BBT, NSEL)
        s4 = s.reshape(B, B, T_PAD, NSEL)
        m = jnp.max(s4, axis=1, keepdims=True)
        e = jnp.exp(s4 - m)
        denom = jnp.sum(e, axis=1, keepdims=True)
        p = e * pl.reciprocal(denom, approx=True)     # softmax over the B keys
        p_wide = jnp.dot(p.reshape(B * B * T_PAD, NSEL).astype(bf16), mselT,
                         preferred_element_type=f32).reshape(B, B, T_PAD, H)
        ctx = jnp.sum(p_wide * v3[None, :, :, :], axis=1)             # (B, T, H)

        attn = jnp.dot(ctx.reshape(M, H).astype(bf16),
                       w_ref[wb + W_WO:wb + W_WO + H, :],
                       preferred_element_type=f32)
        attn = attn[:, :H] + p_ref[pb + P_BO:pb + P_BO + 1, :H]

        # post-norm residual block 1 (dropout = identity, eval semantics)
        x1 = _layer_norm(x + attn,
                         p_ref[pb + P_LN1G:pb + P_LN1G + 1, :H],
                         p_ref[pb + P_LN1B:pb + P_LN1B + 1, :H])

        # feed-forward: Linear -> ReLU -> Linear
        ff = jnp.dot(x1.astype(bf16), w_ref[wb + W_W1:wb + W_W1 + H, :],
                     preferred_element_type=f32)
        ff = jnp.maximum(ff[:, :DFF] + p_ref[pb + P_B1:pb + P_B1 + 1, :DFF], 0.0)
        ff = jnp.dot(ff.astype(bf16), w_ref[wb + W_W2:wb + W_W2 + DFF, :],
                     preferred_element_type=f32)
        ff = ff[:, :H] + p_ref[pb + P_B2:pb + P_B2 + 1, :H]

        x = _layer_norm(x1 + ff,
                        p_ref[pb + P_LN2G:pb + P_LN2G + 1, :H],
                        p_ref[pb + P_LN2B:pb + P_LN2B + 1, :H])

    # ---- outputs[:, 0]; self.drop is identity (eval semantics) ----
    out = jnp.concatenate([x[b * T_PAD:b * T_PAD + 1, :] for b in range(B)],
                          axis=0)                                     # (B, H)

    # ---- 3 classifier heads fused (weights NOT shared; concatenated) ----
    h = jnp.dot(out.astype(bf16), w_ref[W_HEAD1:W_HEAD1 + H, :],
                preferred_element_type=f32)
    h = h[:, :N_HEADS_CLS * H] + p_ref[P_HEAD_B1:P_HEAD_B1 + 1, :N_HEADS_CLS * H]
    h = _layer_norm(h.reshape(B, N_HEADS_CLS, H),
                    p_ref[P_HEAD_LNG:P_HEAD_LNG + N_HEADS_CLS, :H],
                    p_ref[P_HEAD_LNB:P_HEAD_LNB + N_HEADS_CLS, :H])
    h = jnp.maximum(h, 0.0).reshape(B, N_HEADS_CLS * H)
    logits = jnp.dot(h.astype(bf16), w_ref[W_HEAD2:W_HEAD2 + N_HEADS_CLS * H, :],
                     preferred_element_type=f32) + p_ref[P_HEAD_B2:P_HEAD_B2 + 1, :]
    o_ref[...] = logits.astype(o_ref.dtype)


# ------------------------------ pallas wrapper --------------------------------
def fused_forward(idm, patches, fp):
    B = patches.shape[0] // N_PATCH
    args = (idm, patches, fp["w_slab"], fp["p_slab"])
    out_shape = jax.ShapeDtypeStruct((B, OUT_PAD), jnp.float32)
    return pl.pallas_call(
        fused_forward_kernel,
        out_shape=out_shape,
        grid=(1,),
        in_specs=_full_specs(args),
        out_specs=pl.BlockSpec(out_shape.shape, _zero_map(2)),
        compiler_params=pltpu.CompilerParams(dimension_semantics=("arbitrary",)),
    )(*args)


# --------------------------------- forward ------------------------------------
def tour_classifier_forward(fused_params, input_ids, attention_mask, pixel_values):
    # patchify NCHW pixels for the in-kernel patch-embedding matmul (layout only)
    B, C, Hh, Ww = pixel_values.shape
    nph, npw = Hh // PATCH, Ww // PATCH
    patches = (
        pixel_values.reshape(B, C, nph, PATCH, npw, PATCH)
        .transpose(0, 2, 4, 1, 3, 5)
        .reshape(B * nph * npw, C * PATCH * PATCH)
    )
    # ids + mask combined into one tiny int32 input (gather happens in-kernel)
    idm = jnp.stack([input_ids.reshape(-1), attention_mask.reshape(-1)],
                    axis=1).astype(jnp.int32)                     # (B*LT, 2)

    logits = fused_forward(idm, patches, fused_params)            # (B, OUT_PAD)
    out1 = logits[:, :N_CLS1]
    out2 = logits[:, N_CLS1:N_CLS1 + N_CLS2]
    out3 = logits[:, N_CLS1 + N_CLS2:N_CLS1 + N_CLS2 + N_CLS3]
    return out1, out2, out3


# ------------------------------ parameter init ---------------------------------
def init_params(key):
    keys = list(jax.random.split(key, 64))
    kit = iter(keys)

    def nrm(shape, scale=0.02):
        return scale * jax.random.normal(next(kit), shape, jnp.float32)

    params = {
        "text_emb": nrm((VOCAB, HIDDEN)),
        "patch_w": nrm((PATCH_DIM, HIDDEN)),
        "patch_b": jnp.zeros((HIDDEN,), jnp.float32),
        "img_cls": nrm((1, 1, HIDDEN)),
    }

    def enc_layer():
        return {
            "wq": nrm((HIDDEN, HIDDEN)), "bq": jnp.zeros((HIDDEN,), jnp.float32),
            "wk": nrm((HIDDEN, HIDDEN)), "bk": jnp.zeros((HIDDEN,), jnp.float32),
            "wv": nrm((HIDDEN, HIDDEN)), "bv": jnp.zeros((HIDDEN,), jnp.float32),
            "wo": nrm((HIDDEN, HIDDEN)), "bo": jnp.zeros((HIDDEN,), jnp.float32),
            "w1": nrm((HIDDEN, DFF)), "b1": jnp.zeros((DFF,), jnp.float32),
            "w2": nrm((DFF, HIDDEN)), "b2": jnp.zeros((HIDDEN,), jnp.float32),
            "ln1_g": jnp.ones((HIDDEN,), jnp.float32),
            "ln1_b": jnp.zeros((HIDDEN,), jnp.float32),
            "ln2_g": jnp.ones((HIDDEN,), jnp.float32),
            "ln2_b": jnp.zeros((HIDDEN,), jnp.float32),
        }

    params["enc_layers"] = [enc_layer() for _ in range(NLAYERS)]

    def head(n_classes):
        return {
            "w1": nrm((HIDDEN, HIDDEN)), "b1": jnp.zeros((HIDDEN,), jnp.float32),
            "g": jnp.ones((HIDDEN,), jnp.float32),
            "beta": jnp.zeros((HIDDEN,), jnp.float32),
            "w2": nrm((HIDDEN, n_classes)), "b2": jnp.zeros((n_classes,), jnp.float32),
        }

    params["cls1"] = head(N_CLS1)
    params["cls2"] = head(N_CLS2)
    params["cls3"] = head(N_CLS3)
    return params


def prepare_fused_params(params):
    """One-time weight prep: pack everything into two lane-dense slabs.
    bf16 weight slab (W_ROWS, 128): embedding table, patch-embed, fused QKV
    (q-scale folded in), per-layer Wo/W1/W2, fused cls Linears, head-selector.
    f32 slab (P_ROWS, 128): all biases / LayerNorm params, one row each."""
    scale = 1.0 / float(HEAD_DIM) ** 0.5
    H = HIDDEN

    def padw(a):
        return jnp.pad(a, ((0, 0), (0, LANE - a.shape[1])))

    heads = [params["cls1"], params["cls2"], params["cls3"]]
    n_cls = [N_CLS1, N_CLS2, N_CLS3]

    w_blocks = [
        padw(jnp.pad(params["text_emb"], ((0, VOCAB_PAD - VOCAB), (0, 0)))),
        padw(params["patch_w"]),
    ]
    for p in params["enc_layers"]:
        wqkv = jnp.concatenate([p["wq"] * scale, p["wk"], p["wv"]], axis=1)
        w_blocks += [padw(wqkv), padw(p["wo"]), padw(p["w1"]), padw(p["w2"])]
    w_blocks.append(padw(jnp.concatenate([h["w1"] for h in heads], axis=1)))
    # block-diagonal final Linear, zero-padded to a lane-dense OUT_PAD slab
    w2_blk = jnp.zeros((N_HEADS_CLS * H, OUT_PAD), jnp.float32)
    off = 0
    for i, h in enumerate(heads):
        w2_blk = w2_blk.at[i * H:(i + 1) * H, off:off + n_cls[i]].set(h["w2"])
        off += n_cls[i]
    w_blocks.append(w2_blk)
    # 0/1 head-selector and its transpose (for per-head score reduce / broadcast)
    sel = (jnp.arange(H)[:, None] // HEAD_DIM
           == jnp.arange(NHEAD)[None, :]).astype(jnp.float32)        # (H, NHEAD)
    w_blocks.append(padw(sel))
    w_blocks.append(padw(jnp.pad(sel.T, ((0, NSEL - NHEAD), (0, 0)))))
    w_slab = jnp.concatenate(w_blocks, axis=0).astype(jnp.bfloat16)
    assert w_slab.shape == (W_ROWS, LANE)

    def row(vec):
        v = jnp.asarray(vec, jnp.float32).reshape(1, -1)
        return jnp.pad(v, ((0, 0), (0, LANE - v.shape[1])))

    p_rows = [row(params["patch_b"]), row(params["img_cls"].reshape(-1))]
    for p in params["enc_layers"]:
        bqkv = jnp.concatenate([p["bq"] * scale, p["bk"], p["bv"]])
        p_rows += [row(bqkv), row(p["bo"]), row(p["b1"]), row(p["b2"]),
                   row(p["ln1_g"]), row(p["ln1_b"]),
                   row(p["ln2_g"]), row(p["ln2_b"])]
    p_rows.append(row(jnp.concatenate([h["b1"] for h in heads])))
    for h in heads:
        p_rows.append(row(h["g"]))
    for h in heads:
        p_rows.append(row(h["beta"]))
    b2_pad = jnp.zeros((1, OUT_PAD), jnp.float32)
    off = 0
    for i, h in enumerate(heads):
        b2_pad = b2_pad.at[0, off:off + n_cls[i]].set(h["b2"])
        off += n_cls[i]
    p_rows.append(b2_pad)
    p_slab = jnp.concatenate(p_rows, axis=0)
    p_slab = jnp.pad(p_slab, ((0, P_ROWS - p_slab.shape[0]), (0, 0)))
    assert p_slab.shape == (P_ROWS, LANE)

    return {"w_slab": w_slab, "p_slab": p_slab}


# ----------------------------------- main ---------------------------------------
if __name__ == "__main__":
    key = jax.random.PRNGKey(0)
    k_param, k_ids, k_pix = jax.random.split(key, 3)

    params = init_params(k_param)
    fused = prepare_fused_params(params)

    B, LT = 2, SEQ_TEXT
    input_ids = jax.random.randint(k_ids, (B, LT), 0, VOCAB, dtype=jnp.int32)
    attention_mask = jnp.ones((B, LT), jnp.int32)
    # layout: NCHW, as in PyTorch.
    pixel_values = jax.random.normal(k_pix, (B, IMG_C, IMG_HW, IMG_HW), jnp.float32)

    fwd = jax.jit(tour_classifier_forward)
    out1, out2, out3 = fwd(fused, input_ids, attention_mask, pixel_values)
    jax.block_until_ready((out1, out2, out3))

    assert out1.shape == (B, N_CLS1)
    assert out2.shape == (B, N_CLS2)
    assert out3.shape == (B, N_CLS3)
    assert bool(jnp.isfinite(out1).all()
                & jnp.isfinite(out2).all()
                & jnp.isfinite(out3).all())
    print("KERNEL_OK")
</pallas_src>

<mosaic_0001>
module attributes {stable_mosaic.version = 11 : i64} {
  func.func @fused_forward_kernel(%arg0: i32, %arg1: memref<16x2xi32, #tpu.memory_space<vmem>>, %arg2: memref<8x192xf32, #tpu.memory_space<vmem>>, %arg3: memref<784x128xbf16, #tpu.memory_space<vmem>>, %arg4: memref<32x128xf32, #tpu.memory_space<vmem>>, %arg5: memref<2x128xf32, #tpu.memory_space<vmem>>) attributes {dimension_semantics = [#tpu.dimension_semantics<arbitrary>], iteration_bounds = array<i64: 1>, scalar_prefetch = 0 : i64, scratch_operands = 0 : i64, tpu.core_type = #tpu.core_type<tc>, window_params = [{pipeline_mode = #tpu.pipeline_mode<synchronous>, transform_indices = @transform_0, window_bounds = array<i64: 16, 2>}, {pipeline_mode = #tpu.pipeline_mode<synchronous>, transform_indices = @transform_1, window_bounds = array<i64: 8, 192>}, {pipeline_mode = #tpu.pipeline_mode<synchronous>, transform_indices = @transform_2, window_bounds = array<i64: 784, 128>}, {pipeline_mode = #tpu.pipeline_mode<synchronous>, transform_indices = @transform_3, window_bounds = array<i64: 32, 128>}, {pipeline_mode = #tpu.pipeline_mode<synchronous>, transform_indices = @transform_4, window_bounds = array<i64: 2, 128>}]} {
    %c0 = arith.constant 0 : index
    %c0_0 = arith.constant 0 : index
    %0 = vector.load %arg1[%c0, %c0_0] : memref<16x2xi32, #tpu.memory_space<vmem>>, vector<16x1xi32>
    %c0_1 = arith.constant 0 : index
    %c1 = arith.constant 1 : index
    %1 = vector.load %arg1[%c0_1, %c1] : memref<16x2xi32, #tpu.memory_space<vmem>>, vector<16x1xi32>
    %2 = arith.sitofp %1 : vector<16x1xi32> to vector<16x1xbf16>
    %3 = tpu.iota {dimensions = array<i32: 1>} : vector<1x104xi32>
    %4 = vector.broadcast %0 : vector<16x1xi32> to vector<16x104xi32>
    %5 = vector.broadcast %3 : vector<1x104xi32> to vector<16x104xi32>
    %6 = arith.cmpi eq, %4, %5 : vector<16x104xi32>
    %7 = arith.extui %6 : vector<16x104xi1> to vector<16x104xi32>
    %8 = arith.sitofp %7 : vector<16x104xi32> to vector<16x104xf32>
    %9 = arith.truncf %8 : vector<16x104xf32> to vector<16x104xbf16>
    %10 = vector.broadcast %2 : vector<16x1xbf16> to vector<16x104xbf16>
    %11 = arith.mulf %9, %10 : vector<16x104xbf16>
    %c0_2 = arith.constant 0 : index
    %c0_3 = arith.constant 0 : index
    %12 = vector.load %arg3[%c0_2, %c0_3] : memref<784x128xbf16, #tpu.memory_space<vmem>>, vector<104x128xbf16>
    %cst = arith.constant dense<0.000000e+00> : vector<16x128xf32>
    %13 = tpu.matmul %11, %12, %cst {dimension_numbers = #tpu.dot_dimension_numbers<[1], [0], [0], [1], [0, 0, 1, 1], [], []>} : vector<16x104xbf16>, vector<104x128xbf16>, vector<16x128xf32> -> vector<16x128xf32>
    %14 = vector.extract_strided_slice %13 {offsets = [0, 0], sizes = [16, 32], strides = [1, 1]} : vector<16x128xf32> to vector<16x32xf32>
    %c0_4 = arith.constant 0 : index
    %c0_5 = arith.constant 0 : index
    %15 = vector.load %arg2[%c0_4, %c0_5] : memref<8x192xf32, #tpu.memory_space<vmem>>, vector<8x192xf32>
    %16 = arith.truncf %15 : vector<8x192xf32> to vector<8x192xbf16>
    %c104 = arith.constant 104 : index
    %c0_6 = arith.constant 0 : index
    %17 = vector.load %arg3[%c104, %c0_6] : memref<784x128xbf16, #tpu.memory_space<vmem>>, vector<192x128xbf16>
    %cst_7 = arith.constant dense<0.000000e+00> : vector<8x128xf32>
    %18 = tpu.matmul %16, %17, %cst_7 {dimension_numbers = #tpu.dot_dimension_numbers<[1], [0], [0], [1], [0, 0, 1, 1], [], []>} : vector<8x192xbf16>, vector<192x128xbf16>, vector<8x128xf32> -> vector<8x128xf32>
    %19 = vector.extract_strided_slice %18 {offsets = [0, 0], sizes = [8, 32], strides = [1, 1]} : vector<8x128xf32> to vector<8x32xf32>
    %c0_8 = arith.constant 0 : index
    %c0_9 = arith.constant 0 : index
    %20 = vector.load %arg4[%c0_8, %c0_9] : memref<32x128xf32, #tpu.memory_space<vmem>>, vector<1x32xf32>
    %21 = vector.broadcast %20 : vector<1x32xf32> to vector<8x32xf32>
    %22 = arith.addf %19, %21 : vector<8x32xf32>
    %c1_10 = arith.constant 1 : index
    %c0_11 = arith.constant 0 : index
    %23 = vector.load %arg4[%c1_10, %c0_11] : memref<32x128xf32, #tpu.memory_space<vmem>>, vector<1x32xf32>
    %24 = vector.extract_strided_slice %14 {offsets = [0, 0], sizes = [8, 32], strides = [1, 1]} : vector<16x32xf32> to vector<8x32xf32>
    %25 = vector.extract_strided_slice %22 {offsets = [0, 0], sizes = [4, 32], strides = [1, 1]} : vector<8x32xf32> to vector<4x32xf32>
    %cst_12 = arith.constant 0.000000e+00 : f32
    %26 = vector.broadcast %cst_12 : f32 to vector<3x32xf32>
    %27 = vector.extract_strided_slice %14 {offsets = [8, 0], sizes = [8, 32], strides = [1, 1]} : vector<16x32xf32> to vector<8x32xf32>
    %28 = vector.extract_strided_slice %22 {offsets = [4, 0], sizes = [4, 32], strides = [1, 1]} : vector<8x32xf32> to vector<4x32xf32>
    %cst_13 = arith.constant 0.000000e+00 : f32
    %29 = vector.broadcast %cst_13 : f32 to vector<3x32xf32>
    %30 = tpu.concatenate %24, %23, %25, %26, %27, %23, %28, %29 in 0 : vector<8x32xf32>, vector<1x32xf32>, vector<4x32xf32>, vector<3x32xf32>, vector<8x32xf32>, vector<1x32xf32>, vector<4x32xf32>, vector<3x32xf32> -> vector<32x32xf32>
    %c744 = arith.constant 744 : index
    %c0_14 = arith.constant 0 : index
    %31 = vector.load %arg3[%c744, %c0_14] : memref<784x128xbf16, #tpu.memory_space<vmem>>, vector<32x8xbf16>
    %c776 = arith.constant 776 : index
    %c0_15 = arith.constant 0 : index
    %32 = vector.load %arg3[%c776, %c0_15] : memref<784x128xbf16, #tpu.memory_space<vmem>>, vector<8x32xbf16>
    %33 = arith.truncf %30 : vector<32x32xf32> to vector<32x32xbf16>
    %c296 = arith.constant 296 : index
    %c0_16 = arith.constant 0 : index
    %34 = vector.load %arg3[%c296, %c0_16] : memref<784x128xbf16, #tpu.memory_space<vmem>>, vector<32x128xbf16>
    %cst_17 = arith.constant dense<0.000000e+00> : vector<32x128xf32>
    %35 = tpu.matmul %33, %34, %cst_17 {dimension_numbers = #tpu.dot_dimension_numbers<[1], [0], [0], [1], [0, 0, 1, 1], [], []>} : vector<32x32xbf16>, vector<32x128xbf16>, vector<32x128xf32> -> vector<32x128xf32>
    %36 = vector.extract_strided_slice %35 {offsets = [0, 0], sizes = [32, 96], strides = [1, 1]} : vector<32x128xf32> to vector<32x96xf32>
    %c2 = arith.constant 2 : index
    %c0_18 = arith.constant 0 : index
    %37 = vector.load %arg4[%c2, %c0_18] : memref<32x128xf32, #tpu.memory_space<vmem>>, vector<1x96xf32>
    %38 = vector.broadcast %37 : vector<1x96xf32> to vector<32x96xf32>
    %39 = arith.addf %36, %38 : vector<32x96xf32>
    %40 = vector.extract_strided_slice %39 {offsets = [0, 0], sizes = [32, 32], strides = [1, 1]} : vector<32x96xf32> to vector<32x32xf32>
    %41 = vector.shape_cast %40 : vector<32x32xf32> to vector<2x16x32xf32>
    %42 = vector.extract_strided_slice %39 {offsets = [0, 32], sizes = [32, 32], strides = [1, 1]} : vector<32x96xf32> to vector<32x32xf32>
    %43 = vector.shape_cast %42 : vector<32x32xf32> to vector<2x16x32xf32>
    %44 = vector.extract_strided_slice %39 {offsets = [0, 64], sizes = [32, 32], strides = [1, 1]} : vector<32x96xf32> to vector<32x32xf32>
    %45 = vector.shape_cast %44 : vector<32x32xf32> to vector<2x16x32xf32>
    %46 = vector.shape_cast %41 : vector<2x16x32xf32> to vector<2x1x16x32xf32>
    %47 = vector.shape_cast %43 : vector<2x16x32xf32> to vector<1x2x16x32xf32>
    %48 = vector.broadcast %46 : vector<2x1x16x32xf32> to vector<2x2x16x32xf32>
    %49 = vector.broadcast %47 : vector<1x2x16x32xf32> to vector<2x2x16x32xf32>
    %50 = arith.mulf %48, %49 : vector<2x2x16x32xf32>
    %51 = vector.shape_cast %50 : vector<2x2x16x32xf32> to vector<64x32xf32>
    %52 = arith.truncf %51 : vector<64x32xf32> to vector<64x32xbf16>
    %cst_19 = arith.constant dense<0.000000e+00> : vector<64x8xf32>
    %53 = tpu.matmul %52, %31, %cst_19 {dimension_numbers = #tpu.dot_dimension_numbers<[1], [0], [0], [1], [0, 0, 1, 1], [], []>} : vector<64x32xbf16>, vector<32x8xbf16>, vector<64x8xf32> -> vector<64x8xf32>
    %54 = vector.shape_cast %53 : vector<64x8xf32> to vector<2x2x16x8xf32>
    %cst_20 = arith.constant dense<0xFF800000> : vector<2x16x8xf32>
    %55 = vector.multi_reduction <maximumf>, %54, %cst_20 [1] : vector<2x2x16x8xf32> to vector<2x16x8xf32>
    %56 = vector.shape_cast %55 : vector<2x16x8xf32> to vector<2x1x16x8xf32>
    %57 = vector.broadcast %56 : vector<2x1x16x8xf32> to vector<2x2x16x8xf32>
    %58 = arith.subf %54, %57 : vector<2x2x16x8xf32>
    %59 = math.exp %58 : vector<2x2x16x8xf32>
    %cst_21 = arith.constant dense<0.000000e+00> : vector<2x16x8xf32>
    %60 = vector.multi_reduction <add>, %59, %cst_21 [1] : vector<2x2x16x8xf32> to vector<2x16x8xf32>
    %61 = vector.shape_cast %60 : vector<2x16x8xf32> to vector<2x1x16x8xf32>
    %62 = tpu.reciprocal %61 {approx = true} : vector<2x1x16x8xf32> -> vector<2x1x16x8xf32>
    %63 = vector.broadcast %62 : vector<2x1x16x8xf32> to vector<2x2x16x8xf32>
    %64 = arith.mulf %59, %63 : vector<2x2x16x8xf32>
    %65 = vector.shape_cast %64 : vector<2x2x16x8xf32> to vector<64x8xf32>
    %66 = arith.truncf %65 : vector<64x8xf32> to vector<64x8xbf16>
    %cst_22 = arith.constant dense<0.000000e+00> : vector<64x32xf32>
    %67 = tpu.matmul %66, %32, %cst_22 {dimension_numbers = #tpu.dot_dimension_numbers<[1], [0], [0], [1], [0, 0, 1, 1], [], []>} : vector<64x8xbf16>, vector<8x32xbf16>, vector<64x32xf32> -> vector<64x32xf32>
    %68 = vector.shape_cast %67 : vector<64x32xf32> to vector<2x2x16x32xf32>
    %69 = vector.shape_cast %45 : vector<2x16x32xf32> to vector<1x2x16x32xf32>
    %70 = vector.broadcast %69 : vector<1x2x16x32xf32> to vector<2x2x16x32xf32>
    %71 = arith.mulf %68, %70 : vector<2x2x16x32xf32>
    %cst_23 = arith.constant dense<0.000000e+00> : vector<2x16x32xf32>
    %72 = vector.multi_reduction <add>, %71, %cst_23 [1] : vector<2x2x16x32xf32> to vector<2x16x32xf32>
    %73 = vector.shape_cast %72 : vector<2x16x32xf32> to vector<32x32xf32>
    %74 = arith.truncf %73 : vector<32x32xf32> to vector<32x32xbf16>
    %c328 = arith.constant 328 : index
    %c0_24 = arith.constant 0 : index
    %75 = vector.load %arg3[%c328, %c0_24] : memref<784x128xbf16, #tpu.memory_space<vmem>>, vector<32x128xbf16>
    %cst_25 = arith.constant dense<0.000000e+00> : vector<32x128xf32>
    %76 = tpu.matmul %74, %75, %cst_25 {dimension_numbers = #tpu.dot_dimension_numbers<[1], [0], [0], [1], [0, 0, 1, 1], [], []>} : vector<32x32xbf16>, vector<32x128xbf16>, vector<32x128xf32> -> vector<32x128xf32>
    %77 = vector.extract_strided_slice %76 {offsets = [0, 0], sizes = [32, 32], strides = [1, 1]} : vector<32x128xf32> to vector<32x32xf32>
    %c3 = arith.constant 3 : index
    %c0_26 = arith.constant 0 : index
    %78 = vector.load %arg4[%c3, %c0_26] : memref<32x128xf32, #tpu.memory_space<vmem>>, vector<1x32xf32>
    %79 = vector.broadcast %78 : vector<1x32xf32> to vector<32x32xf32>
    %80 = arith.addf %77, %79 : vector<32x32xf32>
    %81 = arith.addf %30, %80 : vector<32x32xf32>
    %c6 = arith.constant 6 : index
    %c0_27 = arith.constant 0 : index
    %82 = vector.load %arg4[%c6, %c0_27] : memref<32x128xf32, #tpu.memory_space<vmem>>, vector<1x32xf32>
    %c7 = arith.constant 7 : index
    %c0_28 = arith.constant 0 : index
    %83 = vector.load %arg4[%c7, %c0_28] : memref<32x128xf32, #tpu.memory_space<vmem>>, vector<1x32xf32>
    %cst_29 = arith.constant dense<0.000000e+00> : vector<32xf32>
    %84 = vector.multi_reduction <add>, %81, %cst_29 [1] : vector<32x32xf32> to vector<32xf32>
    %85 = vector.shape_cast %84 : vector<32xf32> to vector<32x1xf32>
    %cst_30 = arith.constant 3.200000e+01 : f32
    %86 = vector.broadcast %cst_30 : f32 to vector<32x1xf32>
    %87 = arith.divf %85, %86 : vector<32x1xf32>
    %88 = vector.broadcast %87 : vector<32x1xf32> to vector<32x32xf32>
    %89 = arith.subf %81, %88 : vector<32x32xf32>
    %90 = arith.mulf %89, %89 : vector<32x32xf32>
    %cst_31 = arith.constant dense<0.000000e+00> : vector<32xf32>
    %91 = vector.multi_reduction <add>, %90, %cst_31 [1] : vector<32x32xf32> to vector<32xf32>
    %92 = vector.shape_cast %91 : vector<32xf32> to vector<32x1xf32>
    %cst_32 = arith.constant 3.200000e+01 : f32
    %93 = vector.broadcast %cst_32 : f32 to vector<32x1xf32>
    %94 = arith.divf %92, %93 : vector<32x1xf32>
    %95 = vector.broadcast %87 : vector<32x1xf32> to vector<32x32xf32>
    %96 = arith.subf %81, %95 : vector<32x32xf32>
    %cst_33 = arith.constant 9.99999974E-6 : f32
    %97 = vector.broadcast %cst_33 : f32 to vector<32x1xf32>
    %98 = arith.addf %94, %97 : vector<32x1xf32>
    %99 = math.rsqrt %98 : vector<32x1xf32>
    %100 = vector.broadcast %99 : vector<32x1xf32> to vector<32x32xf32>
    %101 = arith.mulf %96, %100 : vector<32x32xf32>
    %102 = vector.broadcast %82 : vector<1x32xf32> to vector<32x32xf32>
    %103 = arith.mulf %101, %102 : vector<32x32xf32>
    %104 = vector.broadcast %83 : vector<1x32xf32> to vector<32x32xf32>
    %105 = arith.addf %103, %104 : vector<32x32xf32>
    %106 = arith.truncf %105 : vector<32x32xf32> to vector<32x32xbf16>
    %c360 = arith.constant 360 : index
    %c0_34 = arith.constant 0 : index
    %107 = vector.load %arg3[%c360, %c0_34] : memref<784x128xbf16, #tpu.memory_space<vmem>>, vector<32x128xbf16>
    %cst_35 = arith.constant dense<0.000000e+00> : vector<32x128xf32>
    %108 = tpu.matmul %106, %107, %cst_35 {dimension_numbers = #tpu.dot_dimension_numbers<[1], [0], [0], [1], [0, 0, 1, 1], [], []>} : vector<32x32xbf16>, vector<32x128xbf16>, vector<32x128xf32> -> vector<32x128xf32>
    %109 = vector.extract_strided_slice %108 {offsets = [0, 0], sizes = [32, 64], strides = [1, 1]} : vector<32x128xf32> to vector<32x64xf32>
    %c4 = arith.constant 4 : index
    %c0_36 = arith.constant 0 : index
    %110 = vector.load %arg4[%c4, %c0_36] : memref<32x128xf32, #tpu.memory_space<vmem>>, vector<1x64xf32>
    %111 = vector.broadcast %110 : vector<1x64xf32> to vector<32x64xf32>
    %112 = arith.addf %109, %111 : vector<32x64xf32>
    %cst_37 = arith.constant 0.000000e+00 : f32
    %113 = vector.broadcast %cst_37 : f32 to vector<32x64xf32>
    %114 = arith.maximumf %112, %113 : vector<32x64xf32>
    %115 = arith.truncf %114 : vector<32x64xf32> to vector<32x64xbf16>
    %c392 = arith.constant 392 : index
    %c0_38 = arith.constant 0 : index
    %116 = vector.load %arg3[%c392, %c0_38] : memref<784x128xbf16, #tpu.memory_space<vmem>>, vector<64x128xbf16>
    %cst_39 = arith.constant dense<0.000000e+00> : vector<32x128xf32>
    %117 = tpu.matmul %115, %116, %cst_39 {dimension_numbers = #tpu.dot_dimension_numbers<[1], [0], [0], [1], [0, 0, 1, 1], [], []>} : vector<32x64xbf16>, vector<64x128xbf16>, vector<32x128xf32> -> vector<32x128xf32>
    %118 = vector.extract_strided_slice %117 {offsets = [0, 0], sizes = [32, 32], strides = [1, 1]} : vector<32x128xf32> to vector<32x32xf32>
    %c5 = arith.constant 5 : index
    %c0_40 = arith.constant 0 : index
    %119 = vector.load %arg4[%c5, %c0_40] : memref<32x128xf32, #tpu.memory_space<vmem>>, vector<1x32xf32>
    %120 = vector.broadcast %119 : vector<1x32xf32> to vector<32x32xf32>
    %121 = arith.addf %118, %120 : vector<32x32xf32>
    %122 = arith.addf %105, %121 : vector<32x32xf32>
    %c8 = arith.constant 8 : index
    %c0_41 = arith.constant 0 : index
    %123 = vector.load %arg4[%c8, %c0_41] : memref<32x128xf32, #tpu.memory_space<vmem>>, vector<1x32xf32>
    %c9 = arith.constant 9 : index
    %c0_42 = arith.constant 0 : index
    %124 = vector.load %arg4[%c9, %c0_42] : memref<32x128xf32, #tpu.memory_space<vmem>>, vector<1x32xf32>
    %cst_43 = arith.constant dense<0.000000e+00> : vector<32xf32>
    %125 = vector.multi_reduction <add>, %122, %cst_43 [1] : vector<32x32xf32> to vector<32xf32>
    %126 = vector.shape_cast %125 : vector<32xf32> to vector<32x1xf32>
    %cst_44 = arith.constant 3.200000e+01 : f32
    %127 = vector.broadcast %cst_44 : f32 to vector<32x1xf32>
    %128 = arith.divf %126, %127 : vector<32x1xf32>
    %129 = vector.broadcast %128 : vector<32x1xf32> to vector<32x32xf32>
    %130 = arith.subf %122, %129 : vector<32x32xf32>
    %131 = arith.mulf %130, %130 : vector<32x32xf32>
    %cst_45 = arith.constant dense<0.000000e+00> : vector<32xf32>
    %132 = vector.multi_reduction <add>, %131, %cst_45 [1] : vector<32x32xf32> to vector<32xf32>
    %133 = vector.shape_cast %132 : vector<32xf32> to vector<32x1xf32>
    %cst_46 = arith.constant 3.200000e+01 : f32
    %134 = vector.broadcast %cst_46 : f32 to vector<32x1xf32>
    %135 = arith.divf %133, %134 : vector<32x1xf32>
    %136 = vector.broadcast %128 : vector<32x1xf32> to vector<32x32xf32>
    %137 = arith.subf %122, %136 : vector<32x32xf32>
    %cst_47 = arith.constant 9.99999974E-6 : f32
    %138 = vector.broadcast %cst_47 : f32 to vector<32x1xf32>
    %139 = arith.addf %135, %138 : vector<32x1xf32>
    %140 = math.rsqrt %139 : vector<32x1xf32>
    %141 = vector.broadcast %140 : vector<32x1xf32> to vector<32x32xf32>
    %142 = arith.mulf %137, %141 : vector<32x32xf32>
    %143 = vector.broadcast %123 : vector<1x32xf32> to vector<32x32xf32>
    %144 = arith.mulf %142, %143 : vector<32x32xf32>
    %145 = vector.broadcast %124 : vector<1x32xf32> to vector<32x32xf32>
    %146 = arith.addf %144, %145 : vector<32x32xf32>
    %147 = arith.truncf %146 : vector<32x32xf32> to vector<32x32xbf16>
    %c456 = arith.constant 456 : index
    %c0_48 = arith.constant 0 : index
    %148 = vector.load %arg3[%c456, %c0_48] : memref<784x128xbf16, #tpu.memory_space<vmem>>, vector<32x128xbf16>
    %cst_49 = arith.constant dense<0.000000e+00> : vector<32x128xf32>
    %149 = tpu.matmul %147, %148, %cst_49 {dimension_numbers = #tpu.dot_dimension_numbers<[1], [0], [0], [1], [0, 0, 1, 1], [], []>} : vector<32x32xbf16>, vector<32x128xbf16>, vector<32x128xf32> -> vector<32x128xf32>
    %150 = vector.extract_strided_slice %149 {offsets = [0, 0], sizes = [32, 96], strides = [1, 1]} : vector<32x128xf32> to vector<32x96xf32>
    %c10 = arith.constant 10 : index
    %c0_50 = arith.constant 0 : index
    %151 = vector.load %arg4[%c10, %c0_50] : memref<32x128xf32, #tpu.memory_space<vmem>>, vector<1x96xf32>
    %152 = vector.broadcast %151 : vector<1x96xf32> to vector<32x96xf32>
    %153 = arith.addf %150, %152 : vector<32x96xf32>
    %154 = vector.extract_strided_slice %153 {offsets = [0, 0], sizes = [32, 32], strides = [1, 1]} : vector<32x96xf32> to vector<32x32xf32>
    %155 = vector.shape_cast %154 : vector<32x32xf32> to vector<2x16x32xf32>
    %156 = vector.extract_strided_slice %153 {offsets = [0, 32], sizes = [32, 32], strides = [1, 1]} : vector<32x96xf32> to vector<32x32xf32>
    %157 = vector.shape_cast %156 : vector<32x32xf32> to vector<2x16x32xf32>
    %158 = vector.extract_strided_slice %153 {offsets = [0, 64], sizes = [32, 32], strides = [1, 1]} : vector<32x96xf32> to vector<32x32xf32>
    %159 = vector.shape_cast %158 : vector<32x32xf32> to vector<2x16x32xf32>
    %160 = vector.shape_cast %155 : vector<2x16x32xf32> to vector<2x1x16x32xf32>
    %161 = vector.shape_cast %157 : vector<2x16x32xf32> to vector<1x2x16x32xf32>
    %162 = vector.broadcast %160 : vector<2x1x16x32xf32> to vector<2x2x16x32xf32>
    %163 = vector.broadcast %161 : vector<1x2x16x32xf32> to vector<2x2x16x32xf32>
    %164 = arith.mulf %162, %163 : vector<2x2x16x32xf32>
    %165 = vector.shape_cast %164 : vector<2x2x16x32xf32> to vector<64x32xf32>
    %166 = arith.truncf %165 : vector<64x32xf32> to vector<64x32xbf16>
    %cst_51 = arith.constant dense<0.000000e+00> : vector<64x8xf32>
    %167 = tpu.matmul %166, %31, %cst_51 {dimension_numbers = #tpu.dot_dimension_numbers<[1], [0], [0], [1], [0, 0, 1, 1], [], []>} : vector<64x32xbf16>, vector<32x8xbf16>, vector<64x8xf32> -> vector<64x8xf32>
    %168 = vector.shape_cast %167 : vector<64x8xf32> to vector<2x2x16x8xf32>
    %cst_52 = arith.constant dense<0xFF800000> : vector<2x16x8xf32>
    %169 = vector.multi_reduction <maximumf>, %168, %cst_52 [1] : vector<2x2x16x8xf32> to vector<2x16x8xf32>
    %170 = vector.shape_cast %169 : vector<2x16x8xf32> to vector<2x1x16x8xf32>
    %171 = vector.broadcast %170 : vector<2x1x16x8xf32> to vector<2x2x16x8xf32>
    %172 = arith.subf %168, %171 : vector<2x2x16x8xf32>
    %173 = math.exp %172 : vector<2x2x16x8xf32>
    %cst_53 = arith.constant dense<0.000000e+00> : vector<2x16x8xf32>
    %174 = vector.multi_reduction <add>, %173, %cst_53 [1] : vector<2x2x16x8xf32> to vector<2x16x8xf32>
    %175 = vector.shape_cast %174 : vector<2x16x8xf32> to vector<2x1x16x8xf32>
    %176 = tpu.reciprocal %175 {approx = true} : vector<2x1x16x8xf32> -> vector<2x1x16x8xf32>
    %177 = vector.broadcast %176 : vector<2x1x16x8xf32> to vector<2x2x16x8xf32>
    %178 = arith.mulf %173, %177 : vector<2x2x16x8xf32>
    %179 = vector.shape_cast %178 : vector<2x2x16x8xf32> to vector<64x8xf32>
    %180 = arith.truncf %179 : vector<64x8xf32> to vector<64x8xbf16>
    %cst_54 = arith.constant dense<0.000000e+00> : vector<64x32xf32>
    %181 = tpu.matmul %180, %32, %cst_54 {dimension_numbers = #tpu.dot_dimension_numbers<[1], [0], [0], [1], [0, 0, 1, 1], [], []>} : vector<64x8xbf16>, vector<8x32xbf16>, vector<64x32xf32> -> vector<64x32xf32>
    %182 = vector.shape_cast %181 : vector<64x32xf32> to vector<2x2x16x32xf32>
    %183 = vector.shape_cast %159 : vector<2x16x32xf32> to vector<1x2x16x32xf32>
    %184 = vector.broadcast %183 : vector<1x2x16x32xf32> to vector<2x2x16x32xf32>
    %185 = arith.mulf %182, %184 : vector<2x2x16x32xf32>
    %cst_55 = arith.constant dense<0.000000e+00> : vector<2x16x32xf32>
    %186 = vector.multi_reduction <add>, %185, %cst_55 [1] : vector<2x2x16x32xf32> to vector<2x16x32xf32>
    %187 = vector.shape_cast %186 : vector<2x16x32xf32> to vector<32x32xf32>
    %188 = arith.truncf %187 : vector<32x32xf32> to vector<32x32xbf16>
    %c488 = arith.constant 488 : index
    %c0_56 = arith.constant 0 : index
    %189 = vector.load %arg3[%c488, %c0_56] : memref<784x128xbf16, #tpu.memory_space<vmem>>, vector<32x128xbf16>
    %cst_57 = arith.constant dense<0.000000e+00> : vector<32x128xf32>
    %190 = tpu.matmul %188, %189, %cst_57 {dimension_numbers = #tpu.dot_dimension_numbers<[1], [0], [0], [1], [0, 0, 1, 1], [], []>} : vector<32x32xbf16>, vector<32x128xbf16>, vector<32x128xf32> -> vector<32x128xf32>
    %191 = vector.extract_strided_slice %190 {offsets = [0, 0], sizes = [32, 32], strides = [1, 1]} : vector<32x128xf32> to vector<32x32xf32>
    %c11 = arith.constant 11 : index
    %c0_58 = arith.constant 0 : index
    %192 = vector.load %arg4[%c11, %c0_58] : memref<32x128xf32, #tpu.memory_space<vmem>>, vector<1x32xf32>
    %193 = vector.broadcast %192 : vector<1x32xf32> to vector<32x32xf32>
    %194 = arith.addf %191, %193 : vector<32x32xf32>
    %195 = arith.addf %146, %194 : vector<32x32xf32>
    %c14 = arith.constant 14 : index
    %c0_59 = arith.constant 0 : index
    %196 = vector.load %arg4[%c14, %c0_59] : memref<32x128xf32, #tpu.memory_space<vmem>>, vector<1x32xf32>
    %c15 = arith.constant 15 : index
    %c0_60 = arith.constant 0 : index
    %197 = vector.load %arg4[%c15, %c0_60] : memref<32x128xf32, #tpu.memory_space<vmem>>, vector<1x32xf32>
    %cst_61 = arith.constant dense<0.000000e+00> : vector<32xf32>
    %198 = vector.multi_reduction <add>, %195, %cst_61 [1] : vector<32x32xf32> to vector<32xf32>
    %199 = vector.shape_cast %198 : vector<32xf32> to vector<32x1xf32>
    %cst_62 = arith.constant 3.200000e+01 : f32
    %200 = vector.broadcast %cst_62 : f32 to vector<32x1xf32>
    %201 = arith.divf %199, %200 : vector<32x1xf32>
    %202 = vector.broadcast %201 : vector<32x1xf32> to vector<32x32xf32>
    %203 = arith.subf %195, %202 : vector<32x32xf32>
    %204 = arith.mulf %203, %203 : vector<32x32xf32>
    %cst_63 = arith.constant dense<0.000000e+00> : vector<32xf32>
    %205 = vector.multi_reduction <add>, %204, %cst_63 [1] : vector<32x32xf32> to vector<32xf32>
    %206 = vector.shape_cast %205 : vector<32xf32> to vector<32x1xf32>
    %cst_64 = arith.constant 3.200000e+01 : f32
    %207 = vector.broadcast %cst_64 : f32 to vector<32x1xf32>
    %208 = arith.divf %206, %207 : vector<32x1xf32>
    %209 = vector.broadcast %201 : vector<32x1xf32> to vector<32x32xf32>
    %210 = arith.subf %195, %209 : vector<32x32xf32>
    %cst_65 = arith.constant 9.99999974E-6 : f32
    %211 = vector.broadcast %cst_65 : f32 to vector<32x1xf32>
    %212 = arith.addf %208, %211 : vector<32x1xf32>
    %213 = math.rsqrt %212 : vector<32x1xf32>
    %214 = vector.broadcast %213 : vector<32x1xf32> to vector<32x32xf32>
    %215 = arith.mulf %210, %214 : vector<32x32xf32>
    %216 = vector.broadcast %196 : vector<1x32xf32> to vector<32x32xf32>
    %217 = arith.mulf %215, %216 : vector<32x32xf32>
    %218 = vector.broadcast %197 : vector<1x32xf32> to vector<32x32xf32>
    %219 = arith.addf %217, %218 : vector<32x32xf32>
    %220 = arith.truncf %219 : vector<32x32xf32> to vector<32x32xbf16>
    %c520 = arith.constant 520 : index
    %c0_66 = arith.constant 0 : index
    %221 = vector.load %arg3[%c520, %c0_66] : memref<784x128xbf16, #tpu.memory_space<vmem>>, vector<32x128xbf16>
    %cst_67 = arith.constant dense<0.000000e+00> : vector<32x128xf32>
    %222 = tpu.matmul %220, %221, %cst_67 {dimension_numbers = #tpu.dot_dimension_numbers<[1], [0], [0], [1], [0, 0, 1, 1], [], []>} : vector<32x32xbf16>, vector<32x128xbf16>, vector<32x128xf32> -> vector<32x128xf32>
    %223 = vector.extract_strided_slice %222 {offsets = [0, 0], sizes = [32, 64], strides = [1, 1]} : vector<32x128xf32> to vector<32x64xf32>
    %c12 = arith.constant 12 : index
    %c0_68 = arith.constant 0 : index
    %224 = vector.load %arg4[%c12, %c0_68] : memref<32x128xf32, #tpu.memory_space<vmem>>, vector<1x64xf32>
    %225 = vector.broadcast %224 : vector<1x64xf32> to vector<32x64xf32>
    %226 = arith.addf %223, %225 : vector<32x64xf32>
    %cst_69 = arith.constant 0.000000e+00 : f32
    %227 = vector.broadcast %cst_69 : f32 to vector<32x64xf32>
    %228 = arith.maximumf %226, %227 : vector<32x64xf32>
    %229 = arith.truncf %228 : vector<32x64xf32> to vector<32x64xbf16>
    %c552 = arith.constant 552 : index
    %c0_70 = arith.constant 0 : index
    %230 = vector.load %arg3[%c552, %c0_70] : memref<784x128xbf16, #tpu.memory_space<vmem>>, vector<64x128xbf16>
    %cst_71 = arith.constant dense<0.000000e+00> : vector<32x128xf32>
    %231 = tpu.matmul %229, %230, %cst_71 {dimension_numbers = #tpu.dot_dimension_numbers<[1], [0], [0], [1], [0, 0, 1, 1], [], []>} : vector<32x64xbf16>, vector<64x128xbf16>, vector<32x128xf32> -> vector<32x128xf32>
    %232 = vector.extract_strided_slice %231 {offsets = [0, 0], sizes = [32, 32], strides = [1, 1]} : vector<32x128xf32> to vector<32x32xf32>
    %c13 = arith.constant 13 : index
    %c0_72 = arith.constant 0 : index
    %233 = vector.load %arg4[%c13, %c0_72] : memref<32x128xf32, #tpu.memory_space<vmem>>, vector<1x32xf32>
    %234 = vector.broadcast %233 : vector<1x32xf32> to vector<32x32xf32>
    %235 = arith.addf %232, %234 : vector<32x32xf32>
    %236 = arith.addf %219, %235 : vector<32x32xf32>
    %c16 = arith.constant 16 : index
    %c0_73 = arith.constant 0 : index
    %237 = vector.load %arg4[%c16, %c0_73] : memref<32x128xf32, #tpu.memory_space<vmem>>, vector<1x32xf32>
    %c17 = arith.constant 17 : index
    %c0_74 = arith.constant 0 : index
    %238 = vector.load %arg4[%c17, %c0_74] : memref<32x128xf32, #tpu.memory_space<vmem>>, vector<1x32xf32>
    %cst_75 = arith.constant dense<0.000000e+00> : vector<32xf32>
    %239 = vector.multi_reduction <add>, %236, %cst_75 [1] : vector<32x32xf32> to vector<32xf32>
    %240 = vector.shape_cast %239 : vector<32xf32> to vector<32x1xf32>
    %cst_76 = arith.constant 3.200000e+01 : f32
    %241 = vector.broadcast %cst_76 : f32 to vector<32x1xf32>
    %242 = arith.divf %240, %241 : vector<32x1xf32>
    %243 = vector.broadcast %242 : vector<32x1xf32> to vector<32x32xf32>
    %244 = arith.subf %236, %243 : vector<32x32xf32>
    %245 = arith.mulf %244, %244 : vector<32x32xf32>
    %cst_77 = arith.constant dense<0.000000e+00> : vector<32xf32>
    %246 = vector.multi_reduction <add>, %245, %cst_77 [1] : vector<32x32xf32> to vector<32xf32>
    %247 = vector.shape_cast %246 : vector<32xf32> to vector<32x1xf32>
    %cst_78 = arith.constant 3.200000e+01 : f32
    %248 = vector.broadcast %cst_78 : f32 to vector<32x1xf32>
    %249 = arith.divf %247, %248 : vector<32x1xf32>
    %250 = vector.broadcast %242 : vector<32x1xf32> to vector<32x32xf32>
    %251 = arith.subf %236, %250 : vector<32x32xf32>
    %cst_79 = arith.constant 9.99999974E-6 : f32
    %252 = vector.broadcast %cst_79 : f32 to vector<32x1xf32>
    %253 = arith.addf %249, %252 : vector<32x1xf32>
    %254 = math.rsqrt %253 : vector<32x1xf32>
    %255 = vector.broadcast %254 : vector<32x1xf32> to vector<32x32xf32>
    %256 = arith.mulf %251, %255 : vector<32x32xf32>
    %257 = vector.broadcast %237 : vector<1x32xf32> to vector<32x32xf32>
    %258 = arith.mulf %256, %257 : vector<32x32xf32>
    %259 = vector.broadcast %238 : vector<1x32xf32> to vector<32x32xf32>
    %260 = arith.addf %258, %259 : vector<32x32xf32>
    %261 = vector.extract_strided_slice %260 {offsets = [0, 0], sizes = [1, 32], strides = [1, 1]} : vector<32x32xf32> to vector<1x32xf32>
    %262 = vector.extract_strided_slice %260 {offsets = [16, 0], sizes = [1, 32], strides = [1, 1]} : vector<32x32xf32> to vector<1x32xf32>
    %263 = tpu.concatenate %261, %262 in 0 : vector<1x32xf32>, vector<1x32xf32> -> vector<2x32xf32>
    %264 = arith.truncf %263 : vector<2x32xf32> to vector<2x32xbf16>
    %c616 = arith.constant 616 : index
    %c0_80 = arith.constant 0 : index
    %265 = vector.load %arg3[%c616, %c0_80] : memref<784x128xbf16, #tpu.memory_space<vmem>>, vector<32x128xbf16>
    %cst_81 = arith.constant dense<0.000000e+00> : vector<2x128xf32>
    %266 = tpu.matmul %264, %265, %cst_81 {dimension_numbers = #tpu.dot_dimension_numbers<[1], [0], [0], [1], [0, 0, 1, 1], [], []>} : vector<2x32xbf16>, vector<32x128xbf16>, vector<2x128xf32> -> vector<2x128xf32>
    %267 = vector.extract_strided_slice %266 {offsets = [0, 0], sizes = [2, 96], strides = [1, 1]} : vector<2x128xf32> to vector<2x96xf32>
    %c18 = arith.constant 18 : index
    %c0_82 = arith.constant 0 : index
    %268 = vector.load %arg4[%c18, %c0_82] : memref<32x128xf32, #tpu.memory_space<vmem>>, vector<1x96xf32>
    %269 = vector.broadcast %268 : vector<1x96xf32> to vector<2x96xf32>
    %270 = arith.addf %267, %269 : vector<2x96xf32>
    %271 = vector.shape_cast %270 : vector<2x96xf32> to vector<2x3x32xf32>
    %c19 = arith.constant 19 : index
    %c0_83 = arith.constant 0 : index
    %272 = vector.load %arg4[%c19, %c0_83] : memref<32x128xf32, #tpu.memory_space<vmem>>, vector<3x32xf32>
    %c22 = arith.constant 22 : index
    %c0_84 = arith.constant 0 : index
    %273 = vector.load %arg4[%c22, %c0_84] : memref<32x128xf32, #tpu.memory_space<vmem>>, vector<3x32xf32>
    %cst_85 = arith.constant dense<0.000000e+00> : vector<2x3xf32>
    %274 = vector.multi_reduction <add>, %271, %cst_85 [2] : vector<2x3x32xf32> to vector<2x3xf32>
    %275 = vector.shape_cast %274 : vector<2x3xf32> to vector<2x3x1xf32>
    %cst_86 = arith.constant 3.200000e+01 : f32
    %276 = vector.broadcast %cst_86 : f32 to vector<2x3x1xf32>
    %277 = arith.divf %275, %276 : vector<2x3x1xf32>
    %278 = vector.broadcast %277 : vector<2x3x1xf32> to vector<2x3x32xf32>
    %279 = arith.subf %271, %278 : vector<2x3x32xf32>
    %280 = arith.mulf %279, %279 : vector<2x3x32xf32>
    %cst_87 = arith.constant dense<0.000000e+00> : vector<2x3xf32>
    %281 = vector.multi_reduction <add>, %280, %cst_87 [2] : vector<2x3x32xf32> to vector<2x3xf32>
    %282 = vector.shape_cast %281 : vector<2x3xf32> to vector<2x3x1xf32>
    %cst_88 = arith.constant 3.200000e+01 : f32
    %283 = vector.broadcast %cst_88 : f32 to vector<2x3x1xf32>
    %284 = arith.divf %282, %283 : vector<2x3x1xf32>
    %285 = vector.broadcast %277 : vector<2x3x1xf32> to vector<2x3x32xf32>
    %286 = arith.subf %271, %285 : vector<2x3x32xf32>
    %cst_89 = arith.constant 9.99999974E-6 : f32
    %287 = vector.broadcast %cst_89 : f32 to vector<2x3x1xf32>
    %288 = arith.addf %284, %287 : vector<2x3x1xf32>
    %289 = math.rsqrt %288 : vector<2x3x1xf32>
    %290 = vector.broadcast %289 : vector<2x3x1xf32> to vector<2x3x32xf32>
    %291 = arith.mulf %286, %290 : vector<2x3x32xf32>
    %292 = vector.shape_cast %272 : vector<3x32xf32> to vector<1x3x32xf32>
    %293 = vector.broadcast %292 : vector<1x3x32xf32> to vector<2x3x32xf32>
    %294 = arith.mulf %291, %293 : vector<2x3x32xf32>
    %295 = vector.shape_cast %273 : vector<3x32xf32> to vector<1x3x32xf32>
    %296 = vector.broadcast %295 : vector<1x3x32xf32> to vector<2x3x32xf32>
    %297 = arith.addf %294, %296 : vector<2x3x32xf32>
    %cst_90 = arith.constant 0.000000e+00 : f32
    %298 = vector.broadcast %cst_90 : f32 to vector<2x3x32xf32>
    %299 = arith.maximumf %297, %298 : vector<2x3x32xf32>
    %300 = vector.shape_cast %299 : vector<2x3x32xf32> to vector<2x96xf32>
    %301 = arith.truncf %300 : vector<2x96xf32> to vector<2x96xbf16>
    %c648 = arith.constant 648 : index
    %c0_91 = arith.constant 0 : index
    %302 = vector.load %arg3[%c648, %c0_91] : memref<784x128xbf16, #tpu.memory_space<vmem>>, vector<96x128xbf16>
    %cst_92 = arith.constant dense<0.000000e+00> : vector<2x128xf32>
    %303 = tpu.matmul %301, %302, %cst_92 {dimension_numbers = #tpu.dot_dimension_numbers<[1], [0], [0], [1], [0, 0, 1, 1], [], []>} : vector<2x96xbf16>, vector<96x128xbf16>, vector<2x128xf32> -> vector<2x128xf32>
    %c25 = arith.constant 25 : index
    %c0_93 = arith.constant 0 : index
    %304 = vector.load %arg4[%c25, %c0_93] : memref<32x128xf32, #tpu.memory_space<vmem>>, vector<1x128xf32>
    %305 = vector.broadcast %304 : vector<1x128xf32> to vector<2x128xf32>
    %306 = arith.addf %303, %305 : vector<2x128xf32>
    %c0_94 = arith.constant 0 : index
    %c0_95 = arith.constant 0 : index
    %307 = vector.load %arg5[%c0_94, %c0_95] : memref<2x128xf32, #tpu.memory_space<vmem>>, vector<2x128xf32>
    tpu.vector_store %arg5[%c0_94, %c0_95], %306 {strides = array<i32>} : memref<2x128xf32, #tpu.memory_space<vmem>>, vector<2x128xf32>,
    return
  }
  func.func @transform_0(%arg0: i32) -> (i32, i32) {
    %c0_i32 = arith.constant 0 : i32
    %c0_i32_0 = arith.constant 0 : i32
    %c0_i32_1 = arith.constant 0 : i32
    return %c0_i32, %c0_i32_0 : i32, i32
  }
  func.func @transform_1(%arg0: i32) -> (i32, i32) {
    %c0_i32 = arith.constant 0 : i32
    %c0_i32_0 = arith.constant 0 : i32
    %c0_i32_1 = arith.constant 0 : i32
    return %c0_i32, %c0_i32_0 : i32, i32
  }
  func.func @transform_2(%arg0: i32) -> (i32, i32) {
    %c0_i32 = arith.constant 0 : i32
    %c0_i32_0 = arith.constant 0 : i32
    %c0_i32_1 = arith.constant 0 : i32
    return %c0_i32, %c0_i32_0 : i32, i32
  }
  func.func @transform_3(%arg0: i32) -> (i32, i32) {
    %c0_i32 = arith.constant 0 : i32
    %c0_i32_0 = arith.constant 0 : i32
    %c0_i32_1 = arith.constant 0 : i32
    return %c0_i32, %c0_i32_0 : i32, i32
  }
  func.func @transform_4(%arg0: i32) -> (i32, i32) {
    %c0_i32 = arith.constant 0 : i32
    %c0_i32_0 = arith.constant 0 : i32
    %c0_i32_1 = arith.constant 0 : i32
    return %c0_i32, %c0_i32_0 : i32, i32
  }
}

</mosaic_0001>

<llo_original>
// kernel: tour_classifier_forward.1
$region0: #{tour_classifier_forward.1}
  #allocation0 [shape = 'u32[]', space=smem, size = 0x4, offset = 0x4, fixed_abs, tag = 'smem constant byte address 0x4 - core index']
  #allocation1 [shape = 'u32[144,128]{1,0:T(1,128)}', space=vmem, size = 0x12000, scoped, tag = 'internal scratch']
  %s0 = inlined_call_operand.vmem [shape: s32[16,2], index: 0, kind: input, shape index: {}]
  %s1 = inlined_call_operand.vmem [shape: f32[8,192], index: 1, kind: input, shape index: {}]
  %s2 = inlined_call_operand.vmem [shape: bf16[784,128], index: 2, kind: input, shape index: {}]
  %s3 = inlined_call_operand.vmem [shape: f32[32,128], index: 3, kind: input, shape index: {}]
  %s4 = inlined_call_operand.vmem [shape: f32[2,128], index: 4, kind: output, shape index: {}]
  %s5 = sld [smem:[#allocation0]]
  $region26: #{tour_classifier_forward.1} parent=0
    _
  %s7 = ssub.s32 1, %s5
  %s8 = scalar_select 0, %s7, %s5
  // Predicated region
  $region2: #{tour_classifier_forward.1} parent=0 // pred_check
    _
  $region3: #{tour_classifier_forward.1} parent=0 // pred_check_branch
    %10 = sbr.rel (0) target = $region5
  $region4: #{tour_classifier_forward.1} parent=0 // pred_region
    _
  $region5: #{tour_classifier_forward.1} parent=0 // pred_fallthru
    _
  // Predicated region
  $region6: #{tour_classifier_forward.1} parent=0 // pred_check
    _
  $region7: #{tour_classifier_forward.1} parent=0 // pred_check_branch
    %12 = sbr.rel (0) target = $region9
  $region8: #{tour_classifier_forward.1} parent=0 // pred_region
    _
  $region9: #{tour_classifier_forward.1} parent=0 // pred_fallthru
    _
  // Predicated region
  $region10: #{tour_classifier_forward.1} parent=0 // pred_check
    _
  $region11: #{tour_classifier_forward.1} parent=0 // pred_check_branch
    %14 = sbr.rel (0) target = $region13
  $region12: #{tour_classifier_forward.1} parent=0 // pred_region
    _
  $region13: #{tour_classifier_forward.1} parent=0 // pred_fallthru
    _
  // Predicated region
  $region14: #{tour_classifier_forward.1} parent=0 // pred_check
    _
  $region15: #{tour_classifier_forward.1} parent=0 // pred_check_branch
    %16 = sbr.rel (0) target = $region17
  $region16: #{tour_classifier_forward.1} parent=0 // pred_region
    _
  $region17: #{tour_classifier_forward.1} parent=0 // pred_fallthru
    _
  %v18 = vld [vmem:[%s0] sm:$0xff]
  %v19 = vld [vmem:[%s0 + $0x8] sm:$0xff]
  %v20 = vcvt.s32.f32 %v18
  %v21 = vcvt.s32.f32 %v19
  %v22 = vpack.c.bf16 %v21, %v20
  %v23 = vlaneseq
  %v24 = vand.u32 %v23, 127
  %25 = vset.pattern.permute.xlu0 0
  %26 = vperm.xlu0 %25, %v18
  %v27 = vpop.permute.xlu0 %26
  %28 = vset.pattern.permute.xlu0 0
  %29 = vperm.xlu0 %28, %v19
  %v30 = vpop.permute.xlu0 %29
  %vm31 = vcmp.eq.s32.totalorder %v27, %v24
  %vm32 = vcmp.eq.s32.totalorder %v30, %v24
  %v33 = vsel %vm31, 1, 0
  %v34 = vsel %vm32, 1, 0
  %v35 = vcvt.s32.f32 %v33
  %v36 = vcvt.s32.f32 %v34
  %v37 = vpack.c.bf16 %v36, %v35
  %39 = vset.pattern.permute.xlu0 1
  %40 = vperm.xlu0 %39, %v22
  %v41 = vpop.permute.xlu0 %40
  %v43 = vmul.bf16 %v37, %v41
  %v44 = vld [vmem:[%s2] sm:$0xf]
  %v45 = vld [vmem:[%s2 + $0x4] sm:$0xf]
  %v46 = vld [vmem:[%s2 + $0x8] sm:$0xf]
  %v47 = vld [vmem:[%s2 + $0xc] sm:$0xf]
  %v48 = vld [vmem:[%s2 + $0x10] sm:$0xf]
  %v49 = vld [vmem:[%s2 + $0x14] sm:$0xf]
  %v50 = vld [vmem:[%s2 + $0x18] sm:$0xf]
  %v51 = vld [vmem:[%s2 + $0x1c] sm:$0xf]
  %v52 = vld [vmem:[%s2 + $0x20] sm:$0xf]
  %v53 = vld [vmem:[%s2 + $0x24] sm:$0xf]
  %v54 = vld [vmem:[%s2 + $0x28] sm:$0xf]
  %v55 = vld [vmem:[%s2 + $0x2c] sm:$0xf]
  %v56 = vld [vmem:[%s2 + $0x30] sm:$0xf]
  %v70 = vunpack.c.l.b16 %v44
  %v71 = vunpack.c.l.b16 %v45
  %v72 = vunpack.c.l.b16 %v46
  %v73 = vunpack.c.l.b16 %v47
  %v74 = vunpack.c.l.b16 %v48
  %v75 = vunpack.c.l.b16 %v49
  %v76 = vunpack.c.l.b16 %v50
  %v77 = vunpack.c.l.b16 %v51
  %v78 = vunpack.c.l.b16 %v52
  %v79 = vunpack.c.l.b16 %v53
  %v80 = vunpack.c.l.b16 %v54
  %v81 = vunpack.c.l.b16 %v55
  %v82 = vunpack.c.l.b16 %v56
  %v83 = vpack.c.b16 %v71, %v70
  %v84 = vpack.c.b16 %v73, %v72
  %v85 = vpack.c.b16 %v75, %v74
  %v86 = vpack.c.b16 %v77, %v76
  %v87 = vpack.c.b16 %v79, %v78
  %v88 = vpack.c.b16 %v81, %v80
  %v89 = vpack.c.b16 %v82, %v82
  %vm96 = vcmask 850944
  %v98 = vsel %vm96, %v43, 0
  %vm100 = vcmask 1043456
  %v102 = vsel %vm100, %v89, 0
  %104 = vmatprep.subr.bf16.mxu0 0
  %105 = vmatpush1.bf16.msra.mxu0 0
  %106 = vmatprep.subr.bf16.mxu0 0
  %107 = vmatpush1.bf16.msra.mxu0 %v102
  %108 = vmatprep.subr.bf16.mxu0 0
  %109 = vmatpush1.bf16.msra.mxu0 %v88
  %110 = vmatprep.subr.bf16.mxu0 0
  %111 = vmatpush1.bf16.msra.mxu0 %v87
  %112 = vmatprep.subr.bf16.mxu0 0
  %113 = vmatpush1.bf16.msra.mxu0 %v86
  %114 = vmatprep.subr.bf16.mxu0 0
  %115 = vmatpush1.bf16.msra.mxu0 %v85
  %116 = vmatprep.subr.bf16.mxu0 0
  %117 = vmatpush1.bf16.msra.mxu0 %v84
  %118 = vmatprep.subr.bf16.mxu0 0
  %119 = vmatpush1.bf16.msra.mxu0 %v83
  %120 = vmatprep.subr.bf16.mxu0 0
  %121 = vmatpush2.bf16.msra.mxu0 0
  %122 = vmatprep.subr.bf16.mxu0 0
  %123 = vmatpush2.bf16.msra.mxu0 0
  %124 = vmatprep.subr.bf16.mxu0 0
  %125 = vmatpush2.bf16.msra.mxu0 0
  %126 = vmatprep.subr.bf16.mxu0 0
  %127 = vmatpush2.bf16.msra.mxu0 0
  %128 = vmatprep.subr.bf16.mxu0 0
  %129 = vmatpush2.bf16.msra.mxu0 0
  %130 = vmatprep.subr.bf16.mxu0 0
  %131 = vmatpush2.bf16.msra.mxu0 0
  %132 = vmatprep.subr.bf16.mxu0 0
  %133 = vmatpush2.bf16.msra.mxu0 0
  %134 = vmatprep.subr.bf16.mxu0 0
  %135 = vmatpush2.bf16.msra.mxu0 0
  %136 = vmatprep.mubr.bf16.mxu0 0
  %137 = vmatmul.mubr.bf16.gmra.mxu0 %v98
  %v138 = vpop.f32.mrf.mxu0
  %v139 = vadd.f32 0.0, %v138
  %v140 = vpop.f32.mrf.mxu0
  %v141 = vpop.f32.mrf.mxu0
  %v142 = vadd.f32 0.0, %v141
  %v143 = vpop.f32.mrf.mxu0
  %144 = vdwg.mxu0
  %v145 = vld [vmem:[%s1] sm:$0xff]
  %v146 = vld [vmem:[%s1 + $0x8] sm:$0xff]
  %v147 = vpack.c.bf16 %v145, %v145
  %v148 = vpack.c.bf16 %v146, %v146
  %v149 = vld [vmem:[%s2 + $0x34] sm:$0xf]
  %v150 = vld [vmem:[%s2 + $0x38] sm:$0xf]
  %v151 = vld [vmem:[%s2 + $0x3c] sm:$0xf]
  %v152 = vld [vmem:[%s2 + $0x40] sm:$0xf]
  %v153 = vld [vmem:[%s2 + $0x44] sm:$0xf]
  %v154 = vld [vmem:[%s2 + $0x48] sm:$0xf]
  %v155 = vld [vmem:[%s2 + $0x4c] sm:$0xf]
  %v156 = vld [vmem:[%s2 + $0x50] sm:$0xf]
  %v157 = vld [vmem:[%s2 + $0x54] sm:$0xf]
  %v158 = vld [vmem:[%s2 + $0x58] sm:$0xf]
  %v159 = vld [vmem:[%s2 + $0x5c] sm:$0xf]
  %v160 = vld [vmem:[%s2 + $0x60] sm:$0xf]
  %v161 = vld [vmem:[%s2 + $0x64] sm:$0xf]
  %v162 = vld [vmem:[%s2 + $0x68] sm:$0xf]
  %v163 = vld [vmem:[%s2 + $0x6c] sm:$0xf]
  %v164 = vld [vmem:[%s2 + $0x70] sm:$0xf]
  %v165 = vld [vmem:[%s2 + $0x74] sm:$0xf]
  %v166 = vld [vmem:[%s2 + $0x78] sm:$0xf]
  %v167 = vld [vmem:[%s2 + $0x7c] sm:$0xf]
  %v168 = vld [vmem:[%s2 + $0x80] sm:$0xf]
  %v169 = vld [vmem:[%s2 + $0x84] sm:$0xf]
  %v170 = vld [vmem:[%s2 + $0x88] sm:$0xf]
  %v171 = vld [vmem:[%s2 + $0x8c] sm:$0xf]
  %v172 = vld [vmem:[%s2 + $0x90] sm:$0xf]
  %v197 = vunpack.c.l.b16 %v149
  %v198 = vunpack.c.l.b16 %v150
  %v199 = vunpack.c.l.b16 %v151
  %v200 = vunpack.c.l.b16 %v152
  %v201 = vunpack.c.l.b16 %v153
  %v202 = vunpack.c.l.b16 %v154
  %v203 = vunpack.c.l.b16 %v155
  %v204 = vunpack.c.l.b16 %v156
  %v205 = vunpack.c.l.b16 %v157
  %v206 = vunpack.c.l.b16 %v158
  %v207 = vunpack.c.l.b16 %v159
  %v208 = vunpack.c.l.b16 %v160
  %v209 = vunpack.c.l.b16 %v161
  %v210 = vunpack.c.l.b16 %v162
  %v211 = vunpack.c.l.b16 %v163
  %v212 = vunpack.c.l.b16 %v164
  %v213 = vunpack.c.l.b16 %v165
  %v214 = vunpack.c.l.b16 %v166
  %v215 = vunpack.c.l.b16 %v167
  %v216 = vunpack.c.l.b16 %v168
  %v217 = vunpack.c.l.b16 %v169
  %v218 = vunpack.c.l.b16 %v170
  %v219 = vunpack.c.l.b16 %v171
  %v220 = vunpack.c.l.b16 %v172
  %v221 = vpack.c.b16 %v198, %v197
  %v222 = vpack.c.b16 %v200, %v199
  %v223 = vpack.c.b16 %v202, %v201
  %v224 = vpack.c.b16 %v204, %v203
  %v225 = vpack.c.b16 %v206, %v205
  %v226 = vpack.c.b16 %v208, %v207
  %v227 = vpack.c.b16 %v210, %v209
  %v228 = vpack.c.b16 %v212, %v211
  %v229 = vpack.c.b16 %v214, %v213
  %v230 = vpack.c.b16 %v216, %v215
  %v231 = vpack.c.b16 %v218, %v217
  %v232 = vpack.c.b16 %v220, %v219
  %vm245 = vcmask 523264
  %v247 = vsel %vm245, %v148, 0
  %249 = vmatprep.subr.bf16.mxu0 0
  %250 = vmatpush1.bf16.msra.mxu0 %v228
  %251 = vmatprep.subr.bf16.mxu0 0
  %252 = vmatpush1.bf16.msra.mxu0 %v227
  %253 = vmatprep.subr.bf16.mxu0 0
  %254 = vmatpush1.bf16.msra.mxu0 %v226
  %255 = vmatprep.subr.bf16.mxu0 0
  %256 = vmatpush1.bf16.msra.mxu0 %v225
  %257 = vmatprep.subr.bf16.mxu0 0
  %258 = vmatpush1.bf16.msra.mxu0 %v224
  %259 = vmatprep.subr.bf16.mxu0 0
  %260 = vmatpush1.bf16.msra.mxu0 %v223
  %261 = vmatprep.subr.bf16.mxu0 0
  %262 = vmatpush1.bf16.msra.mxu0 %v222
  %263 = vmatprep.subr.bf16.mxu0 0
  %264 = vmatpush1.bf16.msra.mxu0 %v221
  %265 = vmatprep.subr.bf16.mxu0 0
  %266 = vmatpush2.bf16.msra.mxu0 0
  %267 = vmatprep.subr.bf16.mxu0 0
  %268 = vmatpush2.bf16.msra.mxu0 0
  %269 = vmatprep.subr.bf16.mxu0 0
  %270 = vmatpush2.bf16.msra.mxu0 0
  %271 = vmatprep.subr.bf16.mxu0 0
  %272 = vmatpush2.bf16.msra.mxu0 0
  %273 = vmatprep.subr.bf16.mxu0 0
  %274 = vmatpush2.bf16.msra.mxu0 %v232
  %275 = vmatprep.subr.bf16.mxu0 0
  %276 = vmatpush2.bf16.msra.mxu0 %v231
  %277 = vmatprep.subr.bf16.mxu0 0
  %278 = vmatpush2.bf16.msra.mxu0 %v230
  %279 = vmatprep.subr.bf16.mxu0 0
  %280 = vmatpush2.bf16.msra.mxu0 %v229
  %281 = vmatprep.mubr.bf16.mxu0 %v247
  %282 = vmatmul.mubr.bf16.gmra.mxu0 %v147
  %v283 = vpop.f32.mrf.mxu0
  %v284 = vadd.f32 0.0, %v283
  %v285 = vpop.f32.mrf.mxu0
  %v286 = vpop.f32.mrf.mxu0
  %v287 = vpop.f32.mrf.mxu0
  %288 = vdwg.mxu0
  %v289 = vld [vmem:[%s3] sm:$0x1]
  %v290 = vlaneseq
  %v291 = vshrl.u32 %v290, 7
  %v292 = vsub.s32 0, %v291
  %v293 = vrot.slane %v289, %v292
  %v294 = vadd.f32 %v284, %v293
  %v295 = vld [vmem:[%s3 + $0x1] sm:$0x1]
  %v297 = vrot.slane %v294, 7
  %v299 = vrot.slane %v294, 3
  %vm301 = vcmask 1040384
  %v302 = vsel %vm301, %v295, %v297
  %vm303 = vcmask 1044480
  %v304 = vsel %vm303, %v302, 0.0
  %v305 = vsel %vm301, %v295, %v299
  %v306 = vsel %vm303, %v305, 0.0
  %v307 = vld [vmem:[%s2 + $0x174] sm:$0xf]
  %v308 = vld [vmem:[%s2 + $0x178] sm:$0xf]
  %v309 = vld [vmem:[%s2 + $0x17c] sm:$0xf]
  %v310 = vld [vmem:[%s2 + $0x180] sm:$0xf]
  %v311 = vld [vmem:[%s2 + $0x184] sm:$0xf]
  %v312 = vpack.c.bf16 %v304, %v139
  %v313 = vpack.c.bf16 %v306, %v142
  %v314 = vld [vmem:[%s2 + $0x94] sm:$0xf]
  %v315 = vld [vmem:[%s2 + $0x98] sm:$0xf]
  %v316 = vld [vmem:[%s2 + $0x9c] sm:$0xf]
  %v317 = vld [vmem:[%s2 + $0xa0] sm:$0xf]
  %v322 = vunpack.c.l.b16 %v314
  %v323 = vunpack.c.l.b16 %v315
  %v324 = vunpack.c.l.b16 %v316
  %v325 = vunpack.c.l.b16 %v317
  %v326 = vpack.c.b16 %v323, %v322
  %v327 = vpack.c.b16 %v325, %v324
  %vm330 = vcmask 261120
  %v332 = vsel %vm330, %v312, 0
  %v335 = vsel %vm330, %v313, 0
  %337 = vmatprep.subr.bf16.mxu0 0
  %338 = vmatpush1.bf16.msra.mxu0 0
  %339 = vmatprep.subr.bf16.mxu0 0
  %340 = vmatpush1.bf16.msra.mxu0 0
  %341 = vmatprep.subr.bf16.mxu0 0
  %342 = vmatpush1.bf16.msra.mxu0 0
  %343 = vmatprep.subr.bf16.mxu0 0
  %344 = vmatpush1.bf16.msra.mxu0 0
  %345 = vmatprep.subr.bf16.mxu0 0
  %346 = vmatpush1.bf16.msra.mxu0 0
  %347 = vmatprep.subr.bf16.mxu0 0
  %348 = vmatpush1.bf16.msra.mxu0 0
  %349 = vmatprep.subr.bf16.mxu0 0
  %350 = vmatpush1.bf16.msra.mxu0 %v327
  %351 = vmatprep.subr.bf16.mxu0 0
  %352 = vmatpush1.bf16.msra.mxu0 %v326
  %353 = vmatprep.subr.bf16.mxu0 0
  %354 = vmatpush2.bf16.msra.mxu0 0
  %355 = vmatprep.subr.bf16.mxu0 0
  %356 = vmatpush2.bf16.msra.mxu0 0
  %357 = vmatprep.subr.bf16.mxu0 0
  %358 = vmatpush2.bf16.msra.mxu0 0
  %359 = vmatprep.subr.bf16.mxu0 0
  %360 = vmatpush2.bf16.msra.mxu0 0
  %361 = vmatprep.subr.bf16.mxu0 0
  %362 = vmatpush2.bf16.msra.mxu0 0
  %363 = vmatprep.subr.bf16.mxu0 0
  %364 = vmatpush2.bf16.msra.mxu0 0
  %365 = vmatprep.subr.bf16.mxu0 0
  %366 = vmatpush2.bf16.msra.mxu0 0
  %367 = vmatprep.subr.bf16.mxu0 0
  %368 = vmatpush2.bf16.msra.mxu0 0
  %369 = vmatprep.mubr.bf16.mxu0 0
  %370 = vmatmul.mubr.bf16.gmra.mxu0 %v332
  %v371 = vpop.f32.mrf.mxu0
  %v372 = vadd.f32 0.0, %v371
  %v373 = vpop.f32.mrf.mxu0
  %v374 = vpop.f32.mrf.mxu0
  %v375 = vadd.f32 0.0, %v374
  %v376 = vpop.f32.mrf.mxu0
  %377 = vmatprep.mubr.bf16.mxu0 0
  %378 = vmatmul.mubr.bf16.gmra.mxu0 %v335
  %v379 = vpop.f32.mrf.mxu0
  %v380 = vadd.f32 0.0, %v379
  %v381 = vpop.f32.mrf.mxu0
  %v382 = vpop.f32.mrf.mxu0
  %v383 = vadd.f32 0.0, %v382
  %v384 = vpop.f32.mrf.mxu0
  %385 = vdwg.mxu0
  %v386 = vld [vmem:[%s3 + $0x2] sm:$0x1]
  %v387 = vlaneseq
  %v388 = vshrl.u32 %v387, 7
  %v389 = vsub.s32 0, %v388
  %v390 = vrot.slane %v386, %v389
  %v391 = vadd.f32 %v372, %v390
  %v392 = vadd.f32 %v375, %v390
  %v393 = vadd.f32 %v380, %v390
  %v394 = vadd.f32 %v383, %v390
  %399 = vrot.lane.b32.xlu0 %v391, 96
  %v400 = vpop.permute.xlu0 %399
  %401 = vrot.lane.b32.xlu0 %v392, 96
  %v402 = vpop.permute.xlu0 %401
  %403 = vrot.lane.b32.xlu0 %v393, 96
  %v404 = vpop.permute.xlu0 %403
  %405 = vrot.lane.b32.xlu0 %v394, 96
  %v406 = vpop.permute.xlu0 %405
  %v411 = vmul.f32 %v391, %v400
  %v412 = vmul.f32 %v392, %v402
  %v413 = vmul.f32 %v391, %v404
  %v414 = vmul.f32 %v392, %v406
  %v415 = vmul.f32 %v393, %v400
  %v416 = vmul.f32 %v394, %v402
  %v417 = vmul.f32 %v393, %v404
  %v418 = vmul.f32 %v394, %v406
  %v419 = vpack.c.bf16 %v412, %v411
  %v420 = vpack.c.bf16 %v414, %v413
  %v421 = vpack.c.bf16 %v416, %v415
  %v422 = vpack.c.bf16 %v418, %v417
  %v427 = vunpack.c.l.b16 %v307
  %v428 = vunpack.c.l.b16 %v308
  %v429 = vunpack.c.l.b16 %v309
  %v430 = vunpack.c.l.b16 %v310
  %v431 = vpack.c.b16 %v428, %v427
  %v432 = vpack.c.b16 %v430, %v429
  %v436 = vsel %vm330, %v419, 0
  %v439 = vsel %vm330, %v420, 0
  %v442 = vsel %vm330, %v421, 0
  %v445 = vsel %vm330, %v422, 0
  %447 = vmatprep.subr.bf16.mxu0 0
  %448 = vmatpush1.bf16.msra.mxu0 0
  %449 = vmatprep.subr.bf16.mxu0 0
  %450 = vmatpush1.bf16.msra.mxu0 0
  %451 = vmatprep.subr.bf16.mxu0 0
  %452 = vmatpush1.bf16.msra.mxu0 0
  %453 = vmatprep.subr.bf16.mxu0 0
  %454 = vmatpush1.bf16.msra.mxu0 0
  %455 = vmatprep.subr.bf16.mxu0 0
  %456 = vmatpush1.bf16.msra.mxu0 0
  %457 = vmatprep.subr.bf16.mxu0 0
  %458 = vmatpush1.bf16.msra.mxu0 0
  %459 = vmatprep.subr.bf16.mxu0 0
  %460 = vmatpush1.bf16.msra.mxu0 %v432
  %461 = vmatprep.subr.bf16.mxu0 0
  %462 = vmatpush1.bf16.msra.mxu0 %v431
  %463 = vmatprep.subr.bf16.mxu0 0
  %464 = vmatpush2.bf16.msra.mxu0 0
  %465 = vmatprep.subr.bf16.mxu0 0
  %466 = vmatpush2.bf16.msra.mxu0 0
  %467 = vmatprep.subr.bf16.mxu0 0
  %468 = vmatpush2.bf16.msra.mxu0 0
  %469 = vmatprep.subr.bf16.mxu0 0
  %470 = vmatpush2.bf16.msra.mxu0 0
  %471 = vmatprep.subr.bf16.mxu0 0
  %472 = vmatpush2.bf16.msra.mxu0 0
  %473 = vmatprep.subr.bf16.mxu0 0
  %474 = vmatpush2.bf16.msra.mxu0 0
  %475 = vmatprep.subr.bf16.mxu0 0
  %476 = vmatpush2.bf16.msra.mxu0 0
  %477 = vmatprep.subr.bf16.mxu0 0
  %478 = vmatpush2.bf16.msra.mxu0 0
  %479 = vmatprep.mubr.bf16.mxu0 0
  %480 = vmatmul.mubr.bf16.gmra.mxu0 %v436
  %v481 = vpop.f32.mrf.mxu0
  %v482 = vadd.f32 0.0, %v481
  %v483 = vpop.f32.mrf.mxu0
  %v484 = vpop.f32.mrf.mxu0
  %v485 = vadd.f32 0.0, %v484
  %v486 = vpop.f32.mrf.mxu0
  %487 = vmatprep.mubr.bf16.mxu0 0
  %488 = vmatmul.mubr.bf16.gmra.mxu0 %v439
  %v489 = vpop.f32.mrf.mxu0
  %v490 = vadd.f32 0.0, %v489
  %v491 = vpop.f32.mrf.mxu0
  %v492 = vpop.f32.mrf.mxu0
  %v493 = vadd.f32 0.0, %v492
  %v494 = vpop.f32.mrf.mxu0
  %495 = vmatprep.mubr.bf16.mxu0 0
  %496 = vmatmul.mubr.bf16.gmra.mxu0 %v442
  %v497 = vpop.f32.mrf.mxu0
  %v498 = vadd.f32 0.0, %v497
  %v499 = vpop.f32.mrf.mxu0
  %v500 = vpop.f32.mrf.mxu0
  %v501 = vadd.f32 0.0, %v500
  %v502 = vpop.f32.mrf.mxu0
  %503 = vmatprep.mubr.bf16.mxu0 0
  %504 = vmatmul.mubr.bf16.gmra.mxu0 %v445
  %v505 = vpop.f32.mrf.mxu0
  %v506 = vadd.f32 0.0, %v505
  %v507 = vpop.f32.mrf.mxu0
  %v508 = vpop.f32.mrf.mxu0
  %v509 = vadd.f32 0.0, %v508
  %v510 = vpop.f32.mrf.mxu0
  %511 = vdwg.mxu0
  %vm512 = vcmask 64512
  %v513 = vsel %vm512, %v482, -inf
  %v514 = vsel %vm512, %v490, -inf
  %v515 = vmax.f32 %v513, %v514
  %v516 = vsel %vm512, %v485, -inf
  %v517 = vsel %vm512, %v493, -inf
  %v518 = vmax.f32 %v516, %v517
  %v519 = vsel %vm512, %v498, -inf
  %v520 = vsel %vm512, %v506, -inf
  %v521 = vmax.f32 %v519, %v520
  %v522 = vsel %vm512, %v501, -inf
  %v523 = vsel %vm512, %v509, -inf
  %v524 = vmax.f32 %v522, %v523
  %v525 = vsub.f32 %v482, %v515
  %v526 = vsub.f32 %v485, %v518
  %v527 = vsub.f32 %v490, %v515
  %v528 = vsub.f32 %v493, %v518
  %v529 = vsub.f32 %v498, %v521
  %v530 = vsub.f32 %v501, %v524
  %v531 = vsub.f32 %v506, %v521
  %v532 = vsub.f32 %v509, %v524
  %v533 = vmul.f32 %v525, 1.442695
  %v534 = vpow.pop %v533
  %v535 = vmul.f32 %v526, 1.442695
  %v536 = vpow.pop %v535
  %v537 = vmul.f32 %v527, 1.442695
  %v538 = vpow.pop %v537
  %v539 = vmul.f32 %v528, 1.442695
  %v540 = vpow.pop %v539
  %v541 = vmul.f32 %v529, 1.442695
  %v542 = vpow.pop %v541
  %v543 = vmul.f32 %v530, 1.442695
  %v544 = vpow.pop %v543
  %v545 = vmul.f32 %v531, 1.442695
  %v546 = vpow.pop %v545
  %v547 = vmul.f32 %v532, 1.442695
  %v548 = vpow.pop %v547
  %v549 = vsel %vm512, %v534, 0.0
  %v550 = vsel %vm512, %v538, 0.0
  %v551 = vadd.f32 %v549, %v550
  %v552 = vsel %vm512, %v536, 0.0
  %v553 = vsel %vm512, %v540, 0.0
  %v554 = vadd.f32 %v552, %v553
  %v555 = vsel %vm512, %v542, 0.0
  %v556 = vsel %vm512, %v546, 0.0
  %v557 = vadd.f32 %v555, %v556
  %v558 = vsel %vm512, %v544, 0.0
  %v559 = vsel %vm512, %v548, 0.0
  %v560 = vadd.f32 %v558, %v559
  %v561 = vrcp.pop %v551
  %v562 = vrcp.pop %v554
  %v563 = vrcp.pop %v557
  %v564 = vrcp.pop %v560
  %v565 = vmul.f32 %v534, %v561
  %v566 = vmul.f32 %v536, %v562
  %v567 = vmul.f32 %v538, %v561
  %v568 = vmul.f32 %v540, %v562
  %v569 = vmul.f32 %v542, %v563
  %v570 = vmul.f32 %v544, %v564
  %v571 = vmul.f32 %v546, %v563
  %v572 = vmul.f32 %v548, %v564
  %v573 = vpack.c.bf16 %v566, %v565
  %v574 = vpack.c.bf16 %v568, %v567
  %v575 = vpack.c.bf16 %v570, %v569
  %v576 = vpack.c.bf16 %v572, %v571
  %v578 = vsel %vm512, %v573, 0
  %v581 = vsel %vm512, %v574, 0
  %v584 = vsel %vm512, %v575, 0
  %v587 = vsel %vm512, %v576, 0
  %v590 = vsel %vm100, %v311, 0
  %592 = vmatprep.subr.bf16.mxu0 0
  %593 = vmatpush1.bf16.msra.mxu0 0
  %594 = vmatprep.subr.bf16.mxu0 0
  %595 = vmatpush1.bf16.msra.mxu0 0
  %596 = vmatprep.subr.bf16.mxu0 0
  %597 = vmatpush1.bf16.msra.mxu0 0
  %598 = vmatprep.subr.bf16.mxu0 0
  %599 = vmatpush1.bf16.msra.mxu0 0
  %600 = vmatprep.subr.bf16.mxu0 0
  %601 = vmatpush1.bf16.msra.mxu0 0
  %602 = vmatprep.subr.bf16.mxu0 0
  %603 = vmatpush1.bf16.msra.mxu0 0
  %604 = vmatprep.subr.bf16.mxu0 0
  %605 = vmatpush1.bf16.msra.mxu0 0
  %606 = vmatprep.subr.bf16.mxu0 0
  %607 = vmatpush1.bf16.msra.mxu0 %v590
  %608 = vmatprep.subr.bf16.mxu0 0
  %609 = vmatpush2.bf16.msra.mxu0 0
  %610 = vmatprep.subr.bf16.mxu0 0
  %611 = vmatpush2.bf16.msra.mxu0 0
  %612 = vmatprep.subr.bf16.mxu0 0
  %613 = vmatpush2.bf16.msra.mxu0 0
  %614 = vmatprep.subr.bf16.mxu0 0
  %615 = vmatpush2.bf16.msra.mxu0 0
  %616 = vmatprep.subr.bf16.mxu0 0
  %617 = vmatpush2.bf16.msra.mxu0 0
  %618 = vmatprep.subr.bf16.mxu0 0
  %619 = vmatpush2.bf16.msra.mxu0 0
  %620 = vmatprep.subr.bf16.mxu0 0
  %621 = vmatpush2.bf16.msra.mxu0 0
  %622 = vmatprep.subr.bf16.mxu0 0
  %623 = vmatpush2.bf16.msra.mxu0 0
  %624 = vmatprep.mubr.bf16.mxu0 0
  %625 = vmatmul.mubr.bf16.gmra.mxu0 %v578
  %v626 = vpop.f32.mrf.mxu0
  %v627 = vadd.f32 0.0, %v626
  %v628 = vpop.f32.mrf.mxu0
  %v629 = vpop.f32.mrf.mxu0
  %v630 = vadd.f32 0.0, %v629
  %v631 = vpop.f32.mrf.mxu0
  %632 = vmatprep.mubr.bf16.mxu0 0
  %633 = vmatmul.mubr.bf16.gmra.mxu0 %v581
  %v634 = vpop.f32.mrf.mxu0
  %v635 = vadd.f32 0.0, %v634
  %v636 = vpop.f32.mrf.mxu0
  %v637 = vpop.f32.mrf.mxu0
  %v638 = vadd.f32 0.0, %v637
  %v639 = vpop.f32.mrf.mxu0
  %640 = vmatprep.mubr.bf16.mxu0 0
  %641 = vmatmul.mubr.bf16.gmra.mxu0 %v584
  %v642 = vpop.f32.mrf.mxu0
  %v643 = vadd.f32 0.0, %v642
  %v644 = vpop.f32.mrf.mxu0
  %v645 = vpop.f32.mrf.mxu0
  %v646 = vadd.f32 0.0, %v645
  %v647 = vpop.f32.mrf.mxu0
  %648 = vmatprep.mubr.bf16.mxu0 0
  %649 = vmatmul.mubr.bf16.gmra.mxu0 %v587
  %v650 = vpop.f32.mrf.mxu0
  %v651 = vadd.f32 0.0, %v650
  %v652 = vpop.f32.mrf.mxu0
  %v653 = vpop.f32.mrf.mxu0
  %v654 = vadd.f32 0.0, %v653
  %v655 = vpop.f32.mrf.mxu0
  %656 = vdwg.mxu0
  %657 = vrot.lane.b32.xlu0 %v391, 64
  %v658 = vpop.permute.xlu0 %657
  %659 = vrot.lane.b32.xlu0 %v392, 64
  %v660 = vpop.permute.xlu0 %659
  %661 = vrot.lane.b32.xlu0 %v393, 64
  %v662 = vpop.permute.xlu0 %661
  %663 = vrot.lane.b32.xlu0 %v394, 64
  %v664 = vpop.permute.xlu0 %663
  %v669 = vmul.f32 %v627, %v658
  %v670 = vmul.f32 %v630, %v660
  %v671 = vmul.f32 %v635, %v662
  %v672 = vmul.f32 %v638, %v664
  %v673 = vmul.f32 %v643, %v658
  %v674 = vmul.f32 %v646, %v660
  %v675 = vmul.f32 %v651, %v662
  %v676 = vmul.f32 %v654, %v664
  %v677 = vsel %vm330, %v669, 0.0
  %v678 = vsel %vm330, %v671, 0.0
  %v679 = vadd.f32 %v677, %v678
  %v680 = vsel %vm330, %v670, 0.0
  %v681 = vsel %vm330, %v672, 0.0
  %v682 = vadd.f32 %v680, %v681
  %v683 = vsel %vm330, %v673, 0.0
  %v684 = vsel %vm330, %v675, 0.0
  %v685 = vadd.f32 %v683, %v684
  %v686 = vsel %vm330, %v674, 0.0
  %v687 = vsel %vm330, %v676, 0.0
  %v688 = vadd.f32 %v686, %v687
  %v689 = vpack.c.bf16 %v682, %v679
  %v690 = vpack.c.bf16 %v688, %v685
  %v691 = vld [vmem:[%s2 + $0xa4] sm:$0xf]
  %v692 = vld [vmem:[%s2 + $0xa8] sm:$0xf]
  %v693 = vld [vmem:[%s2 + $0xac] sm:$0xf]
  %v694 = vld [vmem:[%s2 + $0xb0] sm:$0xf]
  %v699 = vunpack.c.l.b16 %v691
  %v700 = vunpack.c.l.b16 %v692
  %v701 = vunpack.c.l.b16 %v693
  %v702 = vunpack.c.l.b16 %v694
  %v703 = vpack.c.b16 %v700, %v699
  %v704 = vpack.c.b16 %v702, %v701
  %v708 = vsel %vm330, %v689, 0
  %v711 = vsel %vm330, %v690, 0
  %713 = vmatprep.subr.bf16.mxu0 0
  %714 = vmatpush1.bf16.msra.mxu0 0
  %715 = vmatprep.subr.bf16.mxu0 0
  %716 = vmatpush1.bf16.msra.mxu0 0
  %717 = vmatprep.subr.bf16.mxu0 0
  %718 = vmatpush1.bf16.msra.mxu0 0
  %719 = vmatprep.subr.bf16.mxu0 0
  %720 = vmatpush1.bf16.msra.mxu0 0
  %721 = vmatprep.subr.bf16.mxu0 0
  %722 = vmatpush1.bf16.msra.mxu0 0
  %723 = vmatprep.subr.bf16.mxu0 0
  %724 = vmatpush1.bf16.msra.mxu0 0
  %725 = vmatprep.subr.bf16.mxu0 0
  %726 = vmatpush1.bf16.msra.mxu0 %v704
  %727 = vmatprep.subr.bf16.mxu0 0
  %728 = vmatpush1.bf16.msra.mxu0 %v703
  %729 = vmatprep.subr.bf16.mxu0 0
  %730 = vmatpush2.bf16.msra.mxu0 0
  %731 = vmatprep.subr.bf16.mxu0 0
  %732 = vmatpush2.bf16.msra.mxu0 0
  %733 = vmatprep.subr.bf16.mxu0 0
  %734 = vmatpush2.bf16.msra.mxu0 0
  %735 = vmatprep.subr.bf16.mxu0 0
  %736 = vmatpush2.bf16.msra.mxu0 0
  %737 = vmatprep.subr.bf16.mxu0 0
  %738 = vmatpush2.bf16.msra.mxu0 0
  %739 = vmatprep.subr.bf16.mxu0 0
  %740 = vmatpush2.bf16.msra.mxu0 0
  %741 = vmatprep.subr.bf16.mxu0 0
  %742 = vmatpush2.bf16.msra.mxu0 0
  %743 = vmatprep.subr.bf16.mxu0 0
  %744 = vmatpush2.bf16.msra.mxu0 0
  %745 = vmatprep.mubr.bf16.mxu0 0
  %746 = vmatmul.mubr.bf16.gmra.mxu0 %v708
  %v747 = vpop.f32.mrf.mxu0
  %v748 = vadd.f32 0.0, %v747
  %v749 = vpop.f32.mrf.mxu0
  %v750 = vpop.f32.mrf.mxu0
  %v751 = vadd.f32 0.0, %v750
  %v752 = vpop.f32.mrf.mxu0
  %753 = vmatprep.mubr.bf16.mxu0 0
  %754 = vmatmul.mubr.bf16.gmra.mxu0 %v711
  %v755 = vpop.f32.mrf.mxu0
  %v756 = vadd.f32 0.0, %v755
  %v757 = vpop.f32.mrf.mxu0
  %v758 = vpop.f32.mrf.mxu0
  %v759 = vadd.f32 0.0, %v758
  %v760 = vpop.f32.mrf.mxu0
  %761 = vdwg.mxu0
  %v762 = vld [vmem:[%s3 + $0x3] sm:$0x1]
  %v763 = vlaneseq
  %v764 = vshrl.u32 %v763, 7
  %v765 = vsub.s32 0, %v764
  %v766 = vrot.slane %v762, %v765
  %v767 = vadd.f32 %v748, %v766
  %v768 = vadd.f32 %v751, %v766
  %v769 = vadd.f32 %v756, %v766
  %v770 = vadd.f32 %v759, %v766
  %v771 = vadd.f32 %v139, %v767
  %v772 = vadd.f32 %v304, %v768
  %v773 = vadd.f32 %v142, %v769
  %v774 = vadd.f32 %v306, %v770
  %v775 = vld [vmem:[%s3 + $0x6] sm:$0x1]
  %v776 = vld [vmem:[%s3 + $0x7] sm:$0x1]
  %v777 = vsel %vm330, %v771, 0.0
  %778 = vadd.xlane.f32.xlu0 %v777
  %v779 = vpop.xlane.xlu0 %778
  %v780 = vsel %vm330, %v772, 0.0
  %781 = vadd.xlane.f32.xlu0 %v780
  %v782 = vpop.xlane.xlu0 %781
  %v783 = vsel %vm330, %v773, 0.0
  %784 = vadd.xlane.f32.xlu0 %v783
  %v785 = vpop.xlane.xlu0 %784
  %v786 = vsel %vm330, %v774, 0.0
  %787 = vadd.xlane.f32.xlu0 %v786
  %v788 = vpop.xlane.xlu0 %787
  %v789 = vrcp.pop 32.0
  %v790 = vmul.f32 %v779, %v789
  %v791 = vmul.f32 %v782, %v789
  %v792 = vmul.f32 %v785, %v789
  %v793 = vmul.f32 %v788, %v789
  %v794 = vsub.f32 %v771, %v790
  %v795 = vsub.f32 %v772, %v791
  %v796 = vsub.f32 %v773, %v792
  %v797 = vsub.f32 %v774, %v793
  %v798 = vmul.f32 %v794, %v794
  %v799 = vmul.f32 %v795, %v795
  %v800 = vmul.f32 %v796, %v796
  %v801 = vmul.f32 %v797, %v797
  %v802 = vsel %vm330, %v798, 0.0
  %803 = vadd.xlane.f32.xlu0 %v802
  %v804 = vpop.xlane.xlu0 %803
  %v805 = vsel %vm330, %v799, 0.0
  %806 = vadd.xlane.f32.xlu0 %v805
  %v807 = vpop.xlane.xlu0 %806
  %v808 = vsel %vm330, %v800, 0.0
  %809 = vadd.xlane.f32.xlu0 %v808
  %v810 = vpop.xlane.xlu0 %809
  %v811 = vsel %vm330, %v801, 0.0
  %812 = vadd.xlane.f32.xlu0 %v811
  %v813 = vpop.xlane.xlu0 %812
  %v814 = vmul.f32 %v804, %v789
  %v815 = vmul.f32 %v807, %v789
  %v816 = vmul.f32 %v810, %v789
  %v817 = vmul.f32 %v813, %v789
  %v818 = vadd.f32 %v814, 1e-05
  %v819 = vadd.f32 %v815, 1e-05
  %v820 = vadd.f32 %v816, 1e-05
  %v821 = vadd.f32 %v817, 1e-05
  %v822 = vrsqrt.pop %v818
  %v823 = vrsqrt.pop %v819
  %v824 = vrsqrt.pop %v820
  %v825 = vrsqrt.pop %v821
  %v826 = vmul.f32 %v794, %v822
  %v827 = vmul.f32 %v795, %v823
  %v828 = vmul.f32 %v796, %v824
  %v829 = vmul.f32 %v797, %v825
  %v830 = vlaneseq
  %v831 = vshrl.u32 %v830, 7
  %v832 = vsub.s32 0, %v831
  %v833 = vrot.slane %v775, %v832
  %v834 = vmul.f32 %v826, %v833
  %v835 = vmul.f32 %v827, %v833
  %v836 = vmul.f32 %v828, %v833
  %v837 = vmul.f32 %v829, %v833
  %v838 = vlaneseq
  %v839 = vshrl.u32 %v838, 7
  %v840 = vsub.s32 0, %v839
  %v841 = vrot.slane %v776, %v840
  %v842 = vadd.f32 %v834, %v841
  %v843 = vadd.f32 %v835, %v841
  %v844 = vadd.f32 %v836, %v841
  %v845 = vadd.f32 %v837, %v841
  %v846 = vpack.c.bf16 %v843, %v842
  %v847 = vpack.c.bf16 %v845, %v844
  %v848 = vld [vmem:[%s2 + $0xb4] sm:$0xf]
  %v849 = vld [vmem:[%s2 + $0xb8] sm:$0xf]
  %v850 = vld [vmem:[%s2 + $0xbc] sm:$0xf]
  %v851 = vld [vmem:[%s2 + $0xc0] sm:$0xf]
  %v856 = vunpack.c.l.b16 %v848
  %v857 = vunpack.c.l.b16 %v849
  %v858 = vunpack.c.l.b16 %v850
  %v859 = vunpack.c.l.b16 %v851
  %v860 = vpack.c.b16 %v857, %v856
  %v861 = vpack.c.b16 %v859, %v858
  %v865 = vsel %vm330, %v846, 0
  %v868 = vsel %vm330, %v847, 0
  %870 = vmatprep.subr.bf16.mxu0 0
  %871 = vmatpush1.bf16.msra.mxu0 0
  %872 = vmatprep.subr.bf16.mxu0 0
  %873 = vmatpush1.bf16.msra.mxu0 0
  %874 = vmatprep.subr.bf16.mxu0 0
  %875 = vmatpush1.bf16.msra.mxu0 0
  %876 = vmatprep.subr.bf16.mxu0 0
  %877 = vmatpush1.bf16.msra.mxu0 0
  %878 = vmatprep.subr.bf16.mxu0 0
  %879 = vmatpush1.bf16.msra.mxu0 0
  %880 = vmatprep.subr.bf16.mxu0 0
  %881 = vmatpush1.bf16.msra.mxu0 0
  %882 = vmatprep.subr.bf16.mxu0 0
  %883 = vmatpush1.bf16.msra.mxu0 %v861
  %884 = vmatprep.subr.bf16.mxu0 0
  %885 = vmatpush1.bf16.msra.mxu0 %v860
  %886 = vmatprep.subr.bf16.mxu0 0
  %887 = vmatpush2.bf16.msra.mxu0 0
  %888 = vmatprep.subr.bf16.mxu0 0
  %889 = vmatpush2.bf16.msra.mxu0 0
  %890 = vmatprep.subr.bf16.mxu0 0
  %891 = vmatpush2.bf16.msra.mxu0 0
  %892 = vmatprep.subr.bf16.mxu0 0
  %893 = vmatpush2.bf16.msra.mxu0 0
  %894 = vmatprep.subr.bf16.mxu0 0
  %895 = vmatpush2.bf16.msra.mxu0 0
  %896 = vmatprep.subr.bf16.mxu0 0
  %897 = vmatpush2.bf16.msra.mxu0 0
  %898 = vmatprep.subr.bf16.mxu0 0
  %899 = vmatpush2.bf16.msra.mxu0 0
  %900 = vmatprep.subr.bf16.mxu0 0
  %901 = vmatpush2.bf16.msra.mxu0 0
  %902 = vmatprep.mubr.bf16.mxu0 0
  %903 = vmatmul.mubr.bf16.gmra.mxu0 %v865
  %v904 = vpop.f32.mrf.mxu0
  %v905 = vadd.f32 0.0, %v904
  %v906 = vpop.f32.mrf.mxu0
  %v907 = vpop.f32.mrf.mxu0
  %v908 = vadd.f32 0.0, %v907
  %v909 = vpop.f32.mrf.mxu0
  %910 = vmatprep.mubr.bf16.mxu0 0
  %911 = vmatmul.mubr.bf16.gmra.mxu0 %v868
  %v912 = vpop.f32.mrf.mxu0
  %v913 = vadd.f32 0.0, %v912
  %v914 = vpop.f32.mrf.mxu0
  %v915 = vpop.f32.mrf.mxu0
  %v916 = vadd.f32 0.0, %v915
  %v917 = vpop.f32.mrf.mxu0
  %918 = vdwg.mxu0
  %v919 = vld [vmem:[%s3 + $0x4] sm:$0x1]
  %v920 = vlaneseq
  %v921 = vshrl.u32 %v920, 7
  %v922 = vsub.s32 0, %v921
  %v923 = vrot.slane %v919, %v922
  %v924 = vadd.f32 %v905, %v923
  %v925 = vadd.f32 %v908, %v923
  %v926 = vadd.f32 %v913, %v923
  %v927 = vadd.f32 %v916, %v923
  %v928 = vmax.f32 %v924, 0.0
  %v929 = vmax.f32 %v925, 0.0
  %v930 = vmax.f32 %v926, 0.0
  %v931 = vmax.f32 %v927, 0.0
  %v932 = vpack.c.bf16 %v929, %v928
  %v933 = vpack.c.bf16 %v931, %v930
  %v934 = vld [vmem:[%s2 + $0xc4] sm:$0xf]
  %v935 = vld [vmem:[%s2 + $0xc8] sm:$0xf]
  %v936 = vld [vmem:[%s2 + $0xcc] sm:$0xf]
  %v937 = vld [vmem:[%s2 + $0xd0] sm:$0xf]
  %v938 = vld [vmem:[%s2 + $0xd4] sm:$0xf]
  %v939 = vld [vmem:[%s2 + $0xd8] sm:$0xf]
  %v940 = vld [vmem:[%s2 + $0xdc] sm:$0xf]
  %v941 = vld [vmem:[%s2 + $0xe0] sm:$0xf]
  %v950 = vunpack.c.l.b16 %v934
  %v951 = vunpack.c.l.b16 %v935
  %v952 = vunpack.c.l.b16 %v936
  %v953 = vunpack.c.l.b16 %v937
  %v954 = vunpack.c.l.b16 %v938
  %v955 = vunpack.c.l.b16 %v939
  %v956 = vunpack.c.l.b16 %v940
  %v957 = vunpack.c.l.b16 %v941
  %v958 = vpack.c.b16 %v951, %v950
  %v959 = vpack.c.b16 %v953, %v952
  %v960 = vpack.c.b16 %v955, %v954
  %v961 = vpack.c.b16 %v957, %v956
  %v967 = vsel %vm245, %v932, 0
  %v970 = vsel %vm245, %v933, 0
  %972 = vmatprep.subr.bf16.mxu0 0
  %973 = vmatpush1.bf16.msra.mxu0 0
  %974 = vmatprep.subr.bf16.mxu0 0
  %975 = vmatpush1.bf16.msra.mxu0 0
  %976 = vmatprep.subr.bf16.mxu0 0
  %977 = vmatpush1.bf16.msra.mxu0 0
  %978 = vmatprep.subr.bf16.mxu0 0
  %979 = vmatpush1.bf16.msra.mxu0 0
  %980 = vmatprep.subr.bf16.mxu0 0
  %981 = vmatpush1.bf16.msra.mxu0 %v961
  %982 = vmatprep.subr.bf16.mxu0 0
  %983 = vmatpush1.bf16.msra.mxu0 %v960
  %984 = vmatprep.subr.bf16.mxu0 0
  %985 = vmatpush1.bf16.msra.mxu0 %v959
  %986 = vmatprep.subr.bf16.mxu0 0
  %987 = vmatpush1.bf16.msra.mxu0 %v958
  %988 = vmatprep.subr.bf16.mxu0 0
  %989 = vmatpush2.bf16.msra.mxu0 0
  %990 = vmatprep.subr.bf16.mxu0 0
  %991 = vmatpush2.bf16.msra.mxu0 0
  %992 = vmatprep.subr.bf16.mxu0 0
  %993 = vmatpush2.bf16.msra.mxu0 0
  %994 = vmatprep.subr.bf16.mxu0 0
  %995 = vmatpush2.bf16.msra.mxu0 0
  %996 = vmatprep.subr.bf16.mxu0 0
  %997 = vmatpush2.bf16.msra.mxu0 0
  %998 = vmatprep.subr.bf16.mxu0 0
  %999 = vmatpush2.bf16.msra.mxu0 0
  %1000 = vmatprep.subr.bf16.mxu0 0
  %1001 = vmatpush2.bf16.msra.mxu0 0
  %1002 = vmatprep.subr.bf16.mxu0 0
  %1003 = vmatpush2.bf16.msra.mxu0 0
  %1004 = vmatprep.mubr.bf16.mxu0 0
  %1005 = vmatmul.mubr.bf16.gmra.mxu0 %v967
  %v1006 = vpop.f32.mrf.mxu0
  %v1007 = vadd.f32 0.0, %v1006
  %v1008 = vpop.f32.mrf.mxu0
  %v1009 = vpop.f32.mrf.mxu0
  %v1010 = vadd.f32 0.0, %v1009
  %v1011 = vpop.f32.mrf.mxu0
  %1012 = vmatprep.mubr.bf16.mxu0 0
  %1013 = vmatmul.mubr.bf16.gmra.mxu0 %v970
  %v1014 = vpop.f32.mrf.mxu0
  %v1015 = vadd.f32 0.0, %v1014
  %v1016 = vpop.f32.mrf.mxu0
  %v1017 = vpop.f32.mrf.mxu0
  %v1018 = vadd.f32 0.0, %v1017
  %v1019 = vpop.f32.mrf.mxu0
  %1020 = vdwg.mxu0
  %v1021 = vld [vmem:[%s3 + $0x5] sm:$0x1]
  %v1022 = vlaneseq
  %v1023 = vshrl.u32 %v1022, 7
  %v1024 = vsub.s32 0, %v1023
  %v1025 = vrot.slane %v1021, %v1024
  %v1026 = vadd.f32 %v1007, %v1025
  %v1027 = vadd.f32 %v1010, %v1025
  %v1028 = vadd.f32 %v1015, %v1025
  %v1029 = vadd.f32 %v1018, %v1025
  %v1030 = vadd.f32 %v842, %v1026
  %v1031 = vadd.f32 %v843, %v1027
  %v1032 = vadd.f32 %v844, %v1028
  %v1033 = vadd.f32 %v845, %v1029
  %v1034 = vld [vmem:[%s3 + $0x8] sm:$0x1]
  %v1035 = vld [vmem:[%s3 + $0x9] sm:$0x1]
  %v1036 = vsel %vm330, %v1030, 0.0
  %1037 = vadd.xlane.f32.xlu0 %v1036
  %v1038 = vpop.xlane.xlu0 %1037
  %v1039 = vsel %vm330, %v1031, 0.0
  %1040 = vadd.xlane.f32.xlu0 %v1039
  %v1041 = vpop.xlane.xlu0 %1040
  %v1042 = vsel %vm330, %v1032, 0.0
  %1043 = vadd.xlane.f32.xlu0 %v1042
  %v1044 = vpop.xlane.xlu0 %1043
  %v1045 = vsel %vm330, %v1033, 0.0
  %1046 = vadd.xlane.f32.xlu0 %v1045
  %v1047 = vpop.xlane.xlu0 %1046
  %v1048 = vmul.f32 %v1038, %v789
  %v1049 = vmul.f32 %v1041, %v789
  %v1050 = vmul.f32 %v1044, %v789
  %v1051 = vmul.f32 %v1047, %v789
  %v1052 = vsub.f32 %v1030, %v1048
  %v1053 = vsub.f32 %v1031, %v1049
  %v1054 = vsub.f32 %v1032, %v1050
  %v1055 = vsub.f32 %v1033, %v1051
  %v1056 = vmul.f32 %v1052, %v1052
  %v1057 = vmul.f32 %v1053, %v1053
  %v1058 = vmul.f32 %v1054, %v1054
  %v1059 = vmul.f32 %v1055, %v1055
  %v1060 = vsel %vm330, %v1056, 0.0
  %1061 = vadd.xlane.f32.xlu0 %v1060
  %v1062 = vpop.xlane.xlu0 %1061
  %v1063 = vsel %vm330, %v1057, 0.0
  %1064 = vadd.xlane.f32.xlu0 %v1063
  %v1065 = vpop.xlane.xlu0 %1064
  %v1066 = vsel %vm330, %v1058, 0.0
  %1067 = vadd.xlane.f32.xlu0 %v1066
  %v1068 = vpop.xlane.xlu0 %1067
  %v1069 = vsel %vm330, %v1059, 0.0
  %1070 = vadd.xlane.f32.xlu0 %v1069
  %v1071 = vpop.xlane.xlu0 %1070
  %v1072 = vmul.f32 %v1062, %v789
  %v1073 = vmul.f32 %v1065, %v789
  %v1074 = vmul.f32 %v1068, %v789
  %v1075 = vmul.f32 %v1071, %v789
  %v1076 = vadd.f32 %v1072, 1e-05
  %v1077 = vadd.f32 %v1073, 1e-05
  %v1078 = vadd.f32 %v1074, 1e-05
  %v1079 = vadd.f32 %v1075, 1e-05
  %v1080 = vrsqrt.pop %v1076
  %v1081 = vrsqrt.pop %v1077
  %v1082 = vrsqrt.pop %v1078
  %v1083 = vrsqrt.pop %v1079
  %v1084 = vmul.f32 %v1052, %v1080
  %v1085 = vmul.f32 %v1053, %v1081
  %v1086 = vmul.f32 %v1054, %v1082
  %v1087 = vmul.f32 %v1055, %v1083
  %v1088 = vlaneseq
  %v1089 = vshrl.u32 %v1088, 7
  %v1090 = vsub.s32 0, %v1089
  %v1091 = vrot.slane %v1034, %v1090
  %v1092 = vmul.f32 %v1084, %v1091
  %v1093 = vmul.f32 %v1085, %v1091
  %v1094 = vmul.f32 %v1086, %v1091
  %v1095 = vmul.f32 %v1087, %v1091
  %v1096 = vlaneseq
  %v1097 = vshrl.u32 %v1096, 7
  %v1098 = vsub.s32 0, %v1097
  %v1099 = vrot.slane %v1035, %v1098
  %v1100 = vadd.f32 %v1092, %v1099
  %v1101 = vadd.f32 %v1093, %v1099
  %v1102 = vadd.f32 %v1094, %v1099
  %v1103 = vadd.f32 %v1095, %v1099
  %v1104 = vpack.c.bf16 %v1101, %v1100
  %v1105 = vpack.c.bf16 %v1103, %v1102
  %v1106 = vld [vmem:[%s2 + $0xe4] sm:$0xf]
  %v1107 = vld [vmem:[%s2 + $0xe8] sm:$0xf]
  %v1108 = vld [vmem:[%s2 + $0xec] sm:$0xf]
  %v1109 = vld [vmem:[%s2 + $0xf0] sm:$0xf]
  %v1114 = vunpack.c.l.b16 %v1106
  %v1115 = vunpack.c.l.b16 %v1107
  %v1116 = vunpack.c.l.b16 %v1108
  %v1117 = vunpack.c.l.b16 %v1109
  %v1118 = vpack.c.b16 %v1115, %v1114
  %v1119 = vpack.c.b16 %v1117, %v1116
  %v1123 = vsel %vm330, %v1104, 0
  %v1126 = vsel %vm330, %v1105, 0
  %1128 = vmatprep.subr.bf16.mxu0 0
  %1129 = vmatpush1.bf16.msra.mxu0 0
  %1130 = vmatprep.subr.bf16.mxu0 0
  %1131 = vmatpush1.bf16.msra.mxu0 0
  %1132 = vmatprep.subr.bf16.mxu0 0
  %1133 = vmatpush1.bf16.msra.mxu0 0
  %1134 = vmatprep.subr.bf16.mxu0 0
  %1135 = vmatpush1.bf16.msra.mxu0 0
  %1136 = vmatprep.subr.bf16.mxu0 0
  %1137 = vmatpush1.bf16.msra.mxu0 0
  %1138 = vmatprep.subr.bf16.mxu0 0
  %1139 = vmatpush1.bf16.msra.mxu0 0
  %1140 = vmatprep.subr.bf16.mxu0 0
  %1141 = vmatpush1.bf16.msra.mxu0 %v1119
  %1142 = vmatprep.subr.bf16.mxu0 0
  %1143 = vmatpush1.bf16.msra.mxu0 %v1118
  %1144 = vmatprep.subr.bf16.mxu0 0
  %1145 = vmatpush2.bf16.msra.mxu0 0
  %1146 = vmatprep.subr.bf16.mxu0 0
  %1147 = vmatpush2.bf16.msra.mxu0 0
  %1148 = vmatprep.subr.bf16.mxu0 0
  %1149 = vmatpush2.bf16.msra.mxu0 0
  %1150 = vmatprep.subr.bf16.mxu0 0
  %1151 = vmatpush2.bf16.msra.mxu0 0
  %1152 = vmatprep.subr.bf16.mxu0 0
  %1153 = vmatpush2.bf16.msra.mxu0 0
  %1154 = vmatprep.subr.bf16.mxu0 0
  %1155 = vmatpush2.bf16.msra.mxu0 0
  %1156 = vmatprep.subr.bf16.mxu0 0
  %1157 = vmatpush2.bf16.msra.mxu0 0
  %1158 = vmatprep.subr.bf16.mxu0 0
  %1159 = vmatpush2.bf16.msra.mxu0 0
  %1160 = vmatprep.mubr.bf16.mxu0 0
  %1161 = vmatmul.mubr.bf16.gmra.mxu0 %v1123
  %v1162 = vpop.f32.mrf.mxu0
  %v1163 = vadd.f32 0.0, %v1162
  %v1164 = vpop.f32.mrf.mxu0
  %v1165 = vpop.f32.mrf.mxu0
  %v1166 = vadd.f32 0.0, %v1165
  %v1167 = vpop.f32.mrf.mxu0
  %1168 = vmatprep.mubr.bf16.mxu0 0
  %1169 = vmatmul.mubr.bf16.gmra.mxu0 %v1126
  %v1170 = vpop.f32.mrf.mxu0
  %v1171 = vadd.f32 0.0, %v1170
  %v1172 = vpop.f32.mrf.mxu0
  %v1173 = vpop.f32.mrf.mxu0
  %v1174 = vadd.f32 0.0, %v1173
  %v1175 = vpop.f32.mrf.mxu0
  %1176 = vdwg.mxu0
  %v1177 = vld [vmem:[%s3 + $0xa] sm:$0x1]
  %v1178 = vlaneseq
  %v1179 = vshrl.u32 %v1178, 7
  %v1180 = vsub.s32 0, %v1179
  %v1181 = vrot.slane %v1177, %v1180
  %v1182 = vadd.f32 %v1163, %v1181
  %v1183 = vadd.f32 %v1166, %v1181
  %v1184 = vadd.f32 %v1171, %v1181
  %v1185 = vadd.f32 %v1174, %v1181
  %1190 = vrot.lane.b32.xlu0 %v1182, 96
  %v1191 = vpop.permute.xlu0 %1190
  %1192 = vrot.lane.b32.xlu0 %v1183, 96
  %v1193 = vpop.permute.xlu0 %1192
  %1194 = vrot.lane.b32.xlu0 %v1184, 96
  %v1195 = vpop.permute.xlu0 %1194
  %1196 = vrot.lane.b32.xlu0 %v1185, 96
  %v1197 = vpop.permute.xlu0 %1196
  %v1202 = vmul.f32 %v1182, %v1191
  %v1203 = vmul.f32 %v1183, %v1193
  %v1204 = vmul.f32 %v1182, %v1195
  %v1205 = vmul.f32 %v1183, %v1197
  %v1206 = vmul.f32 %v1184, %v1191
  %v1207 = vmul.f32 %v1185, %v1193
  %v1208 = vmul.f32 %v1184, %v1195
  %v1209 = vmul.f32 %v1185, %v1197
  %v1210 = vpack.c.bf16 %v1203, %v1202
  %v1211 = vpack.c.bf16 %v1205, %v1204
  %v1212 = vpack.c.bf16 %v1207, %v1206
  %v1213 = vpack.c.bf16 %v1209, %v1208
  %v1215 = vsel %vm330, %v1210, 0
  %v1218 = vsel %vm330, %v1211, 0
  %v1221 = vsel %vm330, %v1212, 0
  %v1224 = vsel %vm330, %v1213, 0
  %1226 = vmatprep.subr.bf16.mxu0 0
  %1227 = vmatpush1.bf16.msra.mxu0 0
  %1228 = vmatprep.subr.bf16.mxu0 0
  %1229 = vmatpush1.bf16.msra.mxu0 0
  %1230 = vmatprep.subr.bf16.mxu0 0
  %1231 = vmatpush1.bf16.msra.mxu0 0
  %1232 = vmatprep.subr.bf16.mxu0 0
  %1233 = vmatpush1.bf16.msra.mxu0 0
  %1234 = vmatprep.subr.bf16.mxu0 0
  %1235 = vmatpush1.bf16.msra.mxu0 0
  %1236 = vmatprep.subr.bf16.mxu0 0
  %1237 = vmatpush1.bf16.msra.mxu0 0
  %1238 = vmatprep.subr.bf16.mxu0 0
  %1239 = vmatpush1.bf16.msra.mxu0 %v432
  %1240 = vmatprep.subr.bf16.mxu0 0
  %1241 = vmatpush1.bf16.msra.mxu0 %v431
  %1242 = vmatprep.subr.bf16.mxu0 0
  %1243 = vmatpush2.bf16.msra.mxu0 0
  %1244 = vmatprep.subr.bf16.mxu0 0
  %1245 = vmatpush2.bf16.msra.mxu0 0
  %1246 = vmatprep.subr.bf16.mxu0 0
  %1247 = vmatpush2.bf16.msra.mxu0 0
  %1248 = vmatprep.subr.bf16.mxu0 0
  %1249 = vmatpush2.bf16.msra.mxu0 0
  %1250 = vmatprep.subr.bf16.mxu0 0
  %1251 = vmatpush2.bf16.msra.mxu0 0
  %1252 = vmatprep.subr.bf16.mxu0 0
  %1253 = vmatpush2.bf16.msra.mxu0 0
  %1254 = vmatprep.subr.bf16.mxu0 0
  %1255 = vmatpush2.bf16.msra.mxu0 0
  %1256 = vmatprep.subr.bf16.mxu0 0
  %1257 = vmatpush2.bf16.msra.mxu0 0
  %1258 = vmatprep.mubr.bf16.mxu0 0
  %1259 = vmatmul.mubr.bf16.gmra.mxu0 %v1215
  %v1260 = vpop.f32.mrf.mxu0
  %v1261 = vadd.f32 0.0, %v1260
  %v1262 = vpop.f32.mrf.mxu0
  %v1263 = vpop.f32.mrf.mxu0
  %v1264 = vadd.f32 0.0, %v1263
  %v1265 = vpop.f32.mrf.mxu0
  %1266 = vmatprep.mubr.bf16.mxu0 0
  %1267 = vmatmul.mubr.bf16.gmra.mxu0 %v1218
  %v1268 = vpop.f32.mrf.mxu0
  %v1269 = vadd.f32 0.0, %v1268
  %v1270 = vpop.f32.mrf.mxu0
  %v1271 = vpop.f32.mrf.mxu0
  %v1272 = vadd.f32 0.0, %v1271
  %v1273 = vpop.f32.mrf.mxu0
  %1274 = vmatprep.mubr.bf16.mxu0 0
  %1275 = vmatmul.mubr.bf16.gmra.mxu0 %v1221
  %v1276 = vpop.f32.mrf.mxu0
  %v1277 = vadd.f32 0.0, %v1276
  %v1278 = vpop.f32.mrf.mxu0
  %v1279 = vpop.f32.mrf.mxu0
  %v1280 = vadd.f32 0.0, %v1279
  %v1281 = vpop.f32.mrf.mxu0
  %1282 = vmatprep.mubr.bf16.mxu0 0
  %1283 = vmatmul.mubr.bf16.gmra.mxu0 %v1224
  %v1284 = vpop.f32.mrf.mxu0
  %v1285 = vadd.f32 0.0, %v1284
  %v1286 = vpop.f32.mrf.mxu0
  %v1287 = vpop.f32.mrf.mxu0
  %v1288 = vadd.f32 0.0, %v1287
  %v1289 = vpop.f32.mrf.mxu0
  %1290 = vdwg.mxu0
  %v1291 = vsel %vm512, %v1261, -inf
  %v1292 = vsel %vm512, %v1269, -inf
  %v1293 = vmax.f32 %v1291, %v1292
  %v1294 = vsel %vm512, %v1264, -inf
  %v1295 = vsel %vm512, %v1272, -inf
  %v1296 = vmax.f32 %v1294, %v1295
  %v1297 = vsel %vm512, %v1277, -inf
  %v1298 = vsel %vm512, %v1285, -inf
  %v1299 = vmax.f32 %v1297, %v1298
  %v1300 = vsel %vm512, %v1280, -inf
  %v1301 = vsel %vm512, %v1288, -inf
  %v1302 = vmax.f32 %v1300, %v1301
  %v1303 = vsub.f32 %v1261, %v1293
  %v1304 = vsub.f32 %v1264, %v1296
  %v1305 = vsub.f32 %v1269, %v1293
  %v1306 = vsub.f32 %v1272, %v1296
  %v1307 = vsub.f32 %v1277, %v1299
  %v1308 = vsub.f32 %v1280, %v1302
  %v1309 = vsub.f32 %v1285, %v1299
  %v1310 = vsub.f32 %v1288, %v1302
  %v1311 = vmul.f32 %v1303, 1.442695
  %v1312 = vpow.pop %v1311
  %v1313 = vmul.f32 %v1304, 1.442695
  %v1314 = vpow.pop %v1313
  %v1315 = vmul.f32 %v1305, 1.442695
  %v1316 = vpow.pop %v1315
  %v1317 = vmul.f32 %v1306, 1.442695
  %v1318 = vpow.pop %v1317
  %v1319 = vmul.f32 %v1307, 1.442695
  %v1320 = vpow.pop %v1319
  %v1321 = vmul.f32 %v1308, 1.442695
  %v1322 = vpow.pop %v1321
  %v1323 = vmul.f32 %v1309, 1.442695
  %v1324 = vpow.pop %v1323
  %v1325 = vmul.f32 %v1310, 1.442695
  %v1326 = vpow.pop %v1325
  %v1327 = vsel %vm512, %v1312, 0.0
  %v1328 = vsel %vm512, %v1316, 0.0
  %v1329 = vadd.f32 %v1327, %v1328
  %v1330 = vsel %vm512, %v1314, 0.0
  %v1331 = vsel %vm512, %v1318, 0.0
  %v1332 = vadd.f32 %v1330, %v1331
  %v1333 = vsel %vm512, %v1320, 0.0
  %v1334 = vsel %vm512, %v1324, 0.0
  %v1335 = vadd.f32 %v1333, %v1334
  %v1336 = vsel %vm512, %v1322, 0.0
  %v1337 = vsel %vm512, %v1326, 0.0
  %v1338 = vadd.f32 %v1336, %v1337
  %v1339 = vrcp.pop %v1329
  %v1340 = vrcp.pop %v1332
  %v1341 = vrcp.pop %v1335
  %v1342 = vrcp.pop %v1338
  %v1343 = vmul.f32 %v1312, %v1339
  %v1344 = vmul.f32 %v1314, %v1340
  %v1345 = vmul.f32 %v1316, %v1339
  %v1346 = vmul.f32 %v1318, %v1340
  %v1347 = vmul.f32 %v1320, %v1341
  %v1348 = vmul.f32 %v1322, %v1342
  %v1349 = vmul.f32 %v1324, %v1341
  %v1350 = vmul.f32 %v1326, %v1342
  %v1351 = vpack.c.bf16 %v1344, %v1343
  %v1352 = vpack.c.bf16 %v1346, %v1345
  %v1353 = vpack.c.bf16 %v1348, %v1347
  %v1354 = vpack.c.bf16 %v1350, %v1349
  %v1356 = vsel %vm512, %v1351, 0
  %v1359 = vsel %vm512, %v1352, 0
  %v1362 = vsel %vm512, %v1353, 0
  %v1365 = vsel %vm512, %v1354, 0
  %1367 = vmatprep.subr.bf16.mxu0 0
  %1368 = vmatpush1.bf16.msra.mxu0 0
  %1369 = vmatprep.subr.bf16.mxu0 0
  %1370 = vmatpush1.bf16.msra.mxu0 0
  %1371 = vmatprep.subr.bf16.mxu0 0
  %1372 = vmatpush1.bf16.msra.mxu0 0
  %1373 = vmatprep.subr.bf16.mxu0 0
  %1374 = vmatpush1.bf16.msra.mxu0 0
  %1375 = vmatprep.subr.bf16.mxu0 0
  %1376 = vmatpush1.bf16.msra.mxu0 0
  %1377 = vmatprep.subr.bf16.mxu0 0
  %1378 = vmatpush1.bf16.msra.mxu0 0
  %1379 = vmatprep.subr.bf16.mxu0 0
  %1380 = vmatpush1.bf16.msra.mxu0 0
  %1381 = vmatprep.subr.bf16.mxu0 0
  %1382 = vmatpush1.bf16.msra.mxu0 %v590
  %1383 = vmatprep.subr.bf16.mxu0 0
  %1384 = vmatpush2.bf16.msra.mxu0 0
  %1385 = vmatprep.subr.bf16.mxu0 0
  %1386 = vmatpush2.bf16.msra.mxu0 0
  %1387 = vmatprep.subr.bf16.mxu0 0
  %1388 = vmatpush2.bf16.msra.mxu0 0
  %1389 = vmatprep.subr.bf16.mxu0 0
  %1390 = vmatpush2.bf16.msra.mxu0 0
  %1391 = vmatprep.subr.bf16.mxu0 0
  %1392 = vmatpush2.bf16.msra.mxu0 0
  %1393 = vmatprep.subr.bf16.mxu0 0
  %1394 = vmatpush2.bf16.msra.mxu0 0
  %1395 = vmatprep.subr.bf16.mxu0 0
  %1396 = vmatpush2.bf16.msra.mxu0 0
  %1397 = vmatprep.subr.bf16.mxu0 0
  %1398 = vmatpush2.bf16.msra.mxu0 0
  %1399 = vmatprep.mubr.bf16.mxu0 0
  %1400 = vmatmul.mubr.bf16.gmra.mxu0 %v1356
  %v1401 = vpop.f32.mrf.mxu0
  %v1402 = vadd.f32 0.0, %v1401
  %v1403 = vpop.f32.mrf.mxu0
  %v1404 = vpop.f32.mrf.mxu0
  %v1405 = vadd.f32 0.0, %v1404
  %v1406 = vpop.f32.mrf.mxu0
  %1407 = vmatprep.mubr.bf16.mxu0 0
  %1408 = vmatmul.mubr.bf16.gmra.mxu0 %v1359
  %v1409 = vpop.f32.mrf.mxu0
  %v1410 = vadd.f32 0.0, %v1409
  %v1411 = vpop.f32.mrf.mxu0
  %v1412 = vpop.f32.mrf.mxu0
  %v1413 = vadd.f32 0.0, %v1412
  %v1414 = vpop.f32.mrf.mxu0
  %1415 = vmatprep.mubr.bf16.mxu0 0
  %1416 = vmatmul.mubr.bf16.gmra.mxu0 %v1362
  %v1417 = vpop.f32.mrf.mxu0
  %v1418 = vadd.f32 0.0, %v1417
  %v1419 = vpop.f32.mrf.mxu0
  %v1420 = vpop.f32.mrf.mxu0
  %v1421 = vadd.f32 0.0, %v1420
  %v1422 = vpop.f32.mrf.mxu0
  %1423 = vmatprep.mubr.bf16.mxu0 0
  %1424 = vmatmul.mubr.bf16.gmra.mxu0 %v1365
  %v1425 = vpop.f32.mrf.mxu0
  %v1426 = vadd.f32 0.0, %v1425
  %v1427 = vpop.f32.mrf.mxu0
  %v1428 = vpop.f32.mrf.mxu0
  %v1429 = vadd.f32 0.0, %v1428
  %v1430 = vpop.f32.mrf.mxu0
  %1431 = vdwg.mxu0
  %1432 = vrot.lane.b32.xlu0 %v1182, 64
  %v1433 = vpop.permute.xlu0 %1432
  %1434 = vrot.lane.b32.xlu0 %v1183, 64
  %v1435 = vpop.permute.xlu0 %1434
  %1436 = vrot.lane.b32.xlu0 %v1184, 64
  %v1437 = vpop.permute.xlu0 %1436
  %1438 = vrot.lane.b32.xlu0 %v1185, 64
  %v1439 = vpop.permute.xlu0 %1438
  %v1444 = vmul.f32 %v1402, %v1433
  %v1445 = vmul.f32 %v1405, %v1435
  %v1446 = vmul.f32 %v1410, %v1437
  %v1447 = vmul.f32 %v1413, %v1439
  %v1448 = vmul.f32 %v1418, %v1433
  %v1449 = vmul.f32 %v1421, %v1435
  %v1450 = vmul.f32 %v1426, %v1437
  %v1451 = vmul.f32 %v1429, %v1439
  %v1452 = vsel %vm330, %v1444, 0.0
  %v1453 = vsel %vm330, %v1446, 0.0
  %v1454 = vadd.f32 %v1452, %v1453
  %v1455 = vsel %vm330, %v1445, 0.0
  %v1456 = vsel %vm330, %v1447, 0.0
  %v1457 = vadd.f32 %v1455, %v1456
  %v1458 = vsel %vm330, %v1448, 0.0
  %v1459 = vsel %vm330, %v1450, 0.0
  %v1460 = vadd.f32 %v1458, %v1459
  %v1461 = vsel %vm330, %v1449, 0.0
  %v1462 = vsel %vm330, %v1451, 0.0
  %v1463 = vadd.f32 %v1461, %v1462
  %v1464 = vpack.c.bf16 %v1457, %v1454
  %v1465 = vpack.c.bf16 %v1463, %v1460
  %v1466 = vld [vmem:[%s2 + $0xf4] sm:$0xf]
  %v1467 = vld [vmem:[%s2 + $0xf8] sm:$0xf]
  %v1468 = vld [vmem:[%s2 + $0xfc] sm:$0xf]
  %v1469 = vld [vmem:[%s2 + $0x100] sm:$0xf]
  %v1474 = vunpack.c.l.b16 %v1466
  %v1475 = vunpack.c.l.b16 %v1467
  %v1476 = vunpack.c.l.b16 %v1468
  %v1477 = vunpack.c.l.b16 %v1469
  %v1478 = vpack.c.b16 %v1475, %v1474
  %v1479 = vpack.c.b16 %v1477, %v1476
  %v1483 = vsel %vm330, %v1464, 0
  %v1486 = vsel %vm330, %v1465, 0
  %1488 = vmatprep.subr.bf16.mxu0 0
  %1489 = vmatpush1.bf16.msra.mxu0 0
  %1490 = vmatprep.subr.bf16.mxu0 0
  %1491 = vmatpush1.bf16.msra.mxu0 0
  %1492 = vmatprep.subr.bf16.mxu0 0
  %1493 = vmatpush1.bf16.msra.mxu0 0
  %1494 = vmatprep.subr.bf16.mxu0 0
  %1495 = vmatpush1.bf16.msra.mxu0 0
  %1496 = vmatprep.subr.bf16.mxu0 0
  %1497 = vmatpush1.bf16.msra.mxu0 0
  %1498 = vmatprep.subr.bf16.mxu0 0
  %1499 = vmatpush1.bf16.msra.mxu0 0
  %1500 = vmatprep.subr.bf16.mxu0 0
  %1501 = vmatpush1.bf16.msra.mxu0 %v1479
  %1502 = vmatprep.subr.bf16.mxu0 0
  %1503 = vmatpush1.bf16.msra.mxu0 %v1478
  %1504 = vmatprep.subr.bf16.mxu0 0
  %1505 = vmatpush2.bf16.msra.mxu0 0
  %1506 = vmatprep.subr.bf16.mxu0 0
  %1507 = vmatpush2.bf16.msra.mxu0 0
  %1508 = vmatprep.subr.bf16.mxu0 0
  %1509 = vmatpush2.bf16.msra.mxu0 0
  %1510 = vmatprep.subr.bf16.mxu0 0
  %1511 = vmatpush2.bf16.msra.mxu0 0
  %1512 = vmatprep.subr.bf16.mxu0 0
  %1513 = vmatpush2.bf16.msra.mxu0 0
  %1514 = vmatprep.subr.bf16.mxu0 0
  %1515 = vmatpush2.bf16.msra.mxu0 0
  %1516 = vmatprep.subr.bf16.mxu0 0
  %1517 = vmatpush2.bf16.msra.mxu0 0
  %1518 = vmatprep.subr.bf16.mxu0 0
  %1519 = vmatpush2.bf16.msra.mxu0 0
  %1520 = vmatprep.mubr.bf16.mxu0 0
  %1521 = vmatmul.mubr.bf16.gmra.mxu0 %v1483
  %v1522 = vpop.f32.mrf.mxu0
  %v1523 = vadd.f32 0.0, %v1522
  %v1524 = vpop.f32.mrf.mxu0
  %v1525 = vpop.f32.mrf.mxu0
  %v1526 = vadd.f32 0.0, %v1525
  %v1527 = vpop.f32.mrf.mxu0
  %1528 = vmatprep.mubr.bf16.mxu0 0
  %1529 = vmatmul.mubr.bf16.gmra.mxu0 %v1486
  %v1530 = vpop.f32.mrf.mxu0
  %v1531 = vadd.f32 0.0, %v1530
  %v1532 = vpop.f32.mrf.mxu0
  %v1533 = vpop.f32.mrf.mxu0
  %v1534 = vadd.f32 0.0, %v1533
  %v1535 = vpop.f32.mrf.mxu0
  %1536 = vdwg.mxu0
  %v1537 = vld [vmem:[%s3 + $0xb] sm:$0x1]
  %v1538 = vlaneseq
  %v1539 = vshrl.u32 %v1538, 7
  %v1540 = vsub.s32 0, %v1539
  %v1541 = vrot.slane %v1537, %v1540
  %v1542 = vadd.f32 %v1523, %v1541
  %v1543 = vadd.f32 %v1526, %v1541
  %v1544 = vadd.f32 %v1531, %v1541
  %v1545 = vadd.f32 %v1534, %v1541
  %v1546 = vadd.f32 %v1100, %v1542
  %v1547 = vadd.f32 %v1101, %v1543
  %v1548 = vadd.f32 %v1102, %v1544
  %v1549 = vadd.f32 %v1103, %v1545
  %v1550 = vld [vmem:[%s3 + $0xe] sm:$0x1]
  %v1551 = vld [vmem:[%s3 + $0xf] sm:$0x1]
  %v1552 = vsel %vm330, %v1546, 0.0
  %1553 = vadd.xlane.f32.xlu0 %v1552
  %v1554 = vpop.xlane.xlu0 %1553
  %v1555 = vsel %vm330, %v1547, 0.0
  %1556 = vadd.xlane.f32.xlu0 %v1555
  %v1557 = vpop.xlane.xlu0 %1556
  %v1558 = vsel %vm330, %v1548, 0.0
  %1559 = vadd.xlane.f32.xlu0 %v1558
  %v1560 = vpop.xlane.xlu0 %1559
  %v1561 = vsel %vm330, %v1549, 0.0
  %1562 = vadd.xlane.f32.xlu0 %v1561
  %v1563 = vpop.xlane.xlu0 %1562
  %v1564 = vmul.f32 %v1554, %v789
  %v1565 = vmul.f32 %v1557, %v789
  %v1566 = vmul.f32 %v1560, %v789
  %v1567 = vmul.f32 %v1563, %v789
  %v1568 = vsub.f32 %v1546, %v1564
  %v1569 = vsub.f32 %v1547, %v1565
  %v1570 = vsub.f32 %v1548, %v1566
  %v1571 = vsub.f32 %v1549, %v1567
  %v1572 = vmul.f32 %v1568, %v1568
  %v1573 = vmul.f32 %v1569, %v1569
  %v1574 = vmul.f32 %v1570, %v1570
  %v1575 = vmul.f32 %v1571, %v1571
  %v1576 = vsel %vm330, %v1572, 0.0
  %1577 = vadd.xlane.f32.xlu0 %v1576
  %v1578 = vpop.xlane.xlu0 %1577
  %v1579 = vsel %vm330, %v1573, 0.0
  %1580 = vadd.xlane.f32.xlu0 %v1579
  %v1581 = vpop.xlane.xlu0 %1580
  %v1582 = vsel %vm330, %v1574, 0.0
  %1583 = vadd.xlane.f32.xlu0 %v1582
  %v1584 = vpop.xlane.xlu0 %1583
  %v1585 = vsel %vm330, %v1575, 0.0
  %1586 = vadd.xlane.f32.xlu0 %v1585
  %v1587 = vpop.xlane.xlu0 %1586
  %v1588 = vmul.f32 %v1578, %v789
  %v1589 = vmul.f32 %v1581, %v789
  %v1590 = vmul.f32 %v1584, %v789
  %v1591 = vmul.f32 %v1587, %v789
  %v1592 = vadd.f32 %v1588, 1e-05
  %v1593 = vadd.f32 %v1589, 1e-05
  %v1594 = vadd.f32 %v1590, 1e-05
  %v1595 = vadd.f32 %v1591, 1e-05
  %v1596 = vrsqrt.pop %v1592
  %v1597 = vrsqrt.pop %v1593
  %v1598 = vrsqrt.pop %v1594
  %v1599 = vrsqrt.pop %v1595
  %v1600 = vmul.f32 %v1568, %v1596
  %v1601 = vmul.f32 %v1569, %v1597
  %v1602 = vmul.f32 %v1570, %v1598
  %v1603 = vmul.f32 %v1571, %v1599
  %v1604 = vlaneseq
  %v1605 = vshrl.u32 %v1604, 7
  %v1606 = vsub.s32 0, %v1605
  %v1607 = vrot.slane %v1550, %v1606
  %v1608 = vmul.f32 %v1600, %v1607
  %v1609 = vmul.f32 %v1601, %v1607
  %v1610 = vmul.f32 %v1602, %v1607
  %v1611 = vmul.f32 %v1603, %v1607
  %v1612 = vlaneseq
  %v1613 = vshrl.u32 %v1612, 7
  %v1614 = vsub.s32 0, %v1613
  %v1615 = vrot.slane %v1551, %v1614
  %v1616 = vadd.f32 %v1608, %v1615
  %v1617 = vadd.f32 %v1609, %v1615
  %v1618 = vadd.f32 %v1610, %v1615
  %v1619 = vadd.f32 %v1611, %v1615
  %v1620 = vpack.c.bf16 %v1617, %v1616
  %v1621 = vpack.c.bf16 %v1619, %v1618
  %v1622 = vld [vmem:[%s2 + $0x104] sm:$0xf]
  %v1623 = vld [vmem:[%s2 + $0x108] sm:$0xf]
  %v1624 = vld [vmem:[%s2 + $0x10c] sm:$0xf]
  %v1625 = vld [vmem:[%s2 + $0x110] sm:$0xf]
  %v1630 = vunpack.c.l.b16 %v1622
  %v1631 = vunpack.c.l.b16 %v1623
  %v1632 = vunpack.c.l.b16 %v1624
  %v1633 = vunpack.c.l.b16 %v1625
  %v1634 = vpack.c.b16 %v1631, %v1630
  %v1635 = vpack.c.b16 %v1633, %v1632
  %v1639 = vsel %vm330, %v1620, 0
  %v1642 = vsel %vm330, %v1621, 0
  %1644 = vmatprep.subr.bf16.mxu0 0
  %1645 = vmatpush1.bf16.msra.mxu0 0
  %1646 = vmatprep.subr.bf16.mxu0 0
  %1647 = vmatpush1.bf16.msra.mxu0 0
  %1648 = vmatprep.subr.bf16.mxu0 0
  %1649 = vmatpush1.bf16.msra.mxu0 0
  %1650 = vmatprep.subr.bf16.mxu0 0
  %1651 = vmatpush1.bf16.msra.mxu0 0
  %1652 = vmatprep.subr.bf16.mxu0 0
  %1653 = vmatpush1.bf16.msra.mxu0 0
  %1654 = vmatprep.subr.bf16.mxu0 0
  %1655 = vmatpush1.bf16.msra.mxu0 0
  %1656 = vmatprep.subr.bf16.mxu0 0
  %1657 = vmatpush1.bf16.msra.mxu0 %v1635
  %1658 = vmatprep.subr.bf16.mxu0 0
  %1659 = vmatpush1.bf16.msra.mxu0 %v1634
  %1660 = vmatprep.subr.bf16.mxu0 0
  %1661 = vmatpush2.bf16.msra.mxu0 0
  %1662 = vmatprep.subr.bf16.mxu0 0
  %1663 = vmatpush2.bf16.msra.mxu0 0
  %1664 = vmatprep.subr.bf16.mxu0 0
  %1665 = vmatpush2.bf16.msra.mxu0 0
  %1666 = vmatprep.subr.bf16.mxu0 0
  %1667 = vmatpush2.bf16.msra.mxu0 0
  %1668 = vmatprep.subr.bf16.mxu0 0
  %1669 = vmatpush2.bf16.msra.mxu0 0
  %1670 = vmatprep.subr.bf16.mxu0 0
  %1671 = vmatpush2.bf16.msra.mxu0 0
  %1672 = vmatprep.subr.bf16.mxu0 0
  %1673 = vmatpush2.bf16.msra.mxu0 0
  %1674 = vmatprep.subr.bf16.mxu0 0
  %1675 = vmatpush2.bf16.msra.mxu0 0
  %1676 = vmatprep.mubr.bf16.mxu0 0
  %1677 = vmatmul.mubr.bf16.gmra.mxu0 %v1639
  %v1678 = vpop.f32.mrf.mxu0
  %v1679 = vadd.f32 0.0, %v1678
  %v1680 = vpop.f32.mrf.mxu0
  %v1681 = vpop.f32.mrf.mxu0
  %v1682 = vadd.f32 0.0, %v1681
  %v1683 = vpop.f32.mrf.mxu0
  %1684 = vmatprep.mubr.bf16.mxu0 0
  %1685 = vmatmul.mubr.bf16.gmra.mxu0 %v1642
  %v1686 = vpop.f32.mrf.mxu0
  %v1687 = vadd.f32 0.0, %v1686
  %v1688 = vpop.f32.mrf.mxu0
  %v1689 = vpop.f32.mrf.mxu0
  %v1690 = vadd.f32 0.0, %v1689
  %v1691 = vpop.f32.mrf.mxu0
  %1692 = vdwg.mxu0
  %v1693 = vld [vmem:[%s3 + $0xc] sm:$0x1]
  %v1694 = vlaneseq
  %v1695 = vshrl.u32 %v1694, 7
  %v1696 = vsub.s32 0, %v1695
  %v1697 = vrot.slane %v1693, %v1696
  %v1698 = vadd.f32 %v1679, %v1697
  %v1699 = vadd.f32 %v1682, %v1697
  %v1700 = vadd.f32 %v1687, %v1697
  %v1701 = vadd.f32 %v1690, %v1697
  %v1702 = vmax.f32 %v1698, 0.0
  %v1703 = vmax.f32 %v1699, 0.0
  %v1704 = vmax.f32 %v1700, 0.0
  %v1705 = vmax.f32 %v1701, 0.0
  %v1706 = vpack.c.bf16 %v1703, %v1702
  %v1707 = vpack.c.bf16 %v1705, %v1704
  %v1708 = vld [vmem:[%s2 + $0x114] sm:$0xf]
  %v1709 = vld [vmem:[%s2 + $0x118] sm:$0xf]
  %v1710 = vld [vmem:[%s2 + $0x11c] sm:$0xf]
  %v1711 = vld [vmem:[%s2 + $0x120] sm:$0xf]
  %v1712 = vld [vmem:[%s2 + $0x124] sm:$0xf]
  %v1713 = vld [vmem:[%s2 + $0x128] sm:$0xf]
  %v1714 = vld [vmem:[%s2 + $0x12c] sm:$0xf]
  %v1715 = vld [vmem:[%s2 + $0x130] sm:$0xf]
  %v1724 = vunpack.c.l.b16 %v1708
  %v1725 = vunpack.c.l.b16 %v1709
  %v1726 = vunpack.c.l.b16 %v1710
  %v1727 = vunpack.c.l.b16 %v1711
  %v1728 = vunpack.c.l.b16 %v1712
  %v1729 = vunpack.c.l.b16 %v1713
  %v1730 = vunpack.c.l.b16 %v1714
  %v1731 = vunpack.c.l.b16 %v1715
  %v1732 = vpack.c.b16 %v1725, %v1724
  %v1733 = vpack.c.b16 %v1727, %v1726
  %v1734 = vpack.c.b16 %v1729, %v1728
  %v1735 = vpack.c.b16 %v1731, %v1730
  %v1741 = vsel %vm245, %v1706, 0
  %v1744 = vsel %vm245, %v1707, 0
  %1746 = vmatprep.subr.bf16.mxu0 0
  %1747 = vmatpush1.bf16.msra.mxu0 0
  %1748 = vmatprep.subr.bf16.mxu0 0
  %1749 = vmatpush1.bf16.msra.mxu0 0
  %1750 = vmatprep.subr.bf16.mxu0 0
  %1751 = vmatpush1.bf16.msra.mxu0 0
  %1752 = vmatprep.subr.bf16.mxu0 0
  %1753 = vmatpush1.bf16.msra.mxu0 0
  %1754 = vmatprep.subr.bf16.mxu0 0
  %1755 = vmatpush1.bf16.msra.mxu0 %v1735
  %1756 = vmatprep.subr.bf16.mxu0 0
  %1757 = vmatpush1.bf16.msra.mxu0 %v1734
  %1758 = vmatprep.subr.bf16.mxu0 0
  %1759 = vmatpush1.bf16.msra.mxu0 %v1733
  %1760 = vmatprep.subr.bf16.mxu0 0
  %1761 = vmatpush1.bf16.msra.mxu0 %v1732
  %1762 = vmatprep.subr.bf16.mxu0 0
  %1763 = vmatpush2.bf16.msra.mxu0 0
  %1764 = vmatprep.subr.bf16.mxu0 0
  %1765 = vmatpush2.bf16.msra.mxu0 0
  %1766 = vmatprep.subr.bf16.mxu0 0
  %1767 = vmatpush2.bf16.msra.mxu0 0
  %1768 = vmatprep.subr.bf16.mxu0 0
  %1769 = vmatpush2.bf16.msra.mxu0 0
  %1770 = vmatprep.subr.bf16.mxu0 0
  %1771 = vmatpush2.bf16.msra.mxu0 0
  %1772 = vmatprep.subr.bf16.mxu0 0
  %1773 = vmatpush2.bf16.msra.mxu0 0
  %1774 = vmatprep.subr.bf16.mxu0 0
  %1775 = vmatpush2.bf16.msra.mxu0 0
  %1776 = vmatprep.subr.bf16.mxu0 0
  %1777 = vmatpush2.bf16.msra.mxu0 0
  %1778 = vmatprep.mubr.bf16.mxu0 0
  %1779 = vmatmul.mubr.bf16.gmra.mxu0 %v1741
  %v1780 = vpop.f32.mrf.mxu0
  %v1781 = vadd.f32 0.0, %v1780
  %v1782 = vpop.f32.mrf.mxu0
  %v1783 = vpop.f32.mrf.mxu0
  %v1784 = vpop.f32.mrf.mxu0
  %1785 = vmatprep.mubr.bf16.mxu0 0
  %1786 = vmatmul.mubr.bf16.gmra.mxu0 %v1744
  %v1787 = vpop.f32.mrf.mxu0
  %v1788 = vadd.f32 0.0, %v1787
  %v1789 = vpop.f32.mrf.mxu0
  %v1790 = vpop.f32.mrf.mxu0
  %v1791 = vpop.f32.mrf.mxu0
  %1792 = vdwg.mxu0
  %v1793 = vld [vmem:[%s3 + $0xd] sm:$0x1]
  %v1794 = vlaneseq
  %v1795 = vshrl.u32 %v1794, 7
  %v1796 = vsub.s32 0, %v1795
  %v1797 = vrot.slane %v1793, %v1796
  %v1798 = vadd.f32 %v1781, %v1797
  %v1799 = vadd.f32 %v1788, %v1797
  %v1800 = vadd.f32 %v1616, %v1798
  %v1801 = vadd.f32 %v1618, %v1799
  %v1802 = vld [vmem:[%s3 + $0x10] sm:$0x1]
  %v1803 = vld [vmem:[%s3 + $0x11] sm:$0x1]
  %v1804 = vsel %vm330, %v1800, 0.0
  %1805 = vadd.xlane.f32.xlu0 %v1804
  %v1806 = vpop.xlane.xlu0 %1805
  %v1807 = vsel %vm330, %v1801, 0.0
  %1808 = vadd.xlane.f32.xlu0 %v1807
  %v1809 = vpop.xlane.xlu0 %1808
  %v1810 = vmul.f32 %v1806, %v789
  %v1811 = vmul.f32 %v1809, %v789
  %v1812 = vsub.f32 %v1800, %v1810
  %v1813 = vsub.f32 %v1801, %v1811
  %v1814 = vmul.f32 %v1812, %v1812
  %v1815 = vmul.f32 %v1813, %v1813
  %v1816 = vsel %vm330, %v1814, 0.0
  %1817 = vadd.xlane.f32.xlu0 %v1816
  %v1818 = vpop.xlane.xlu0 %1817
  %v1819 = vsel %vm330, %v1815, 0.0
  %1820 = vadd.xlane.f32.xlu0 %v1819
  %v1821 = vpop.xlane.xlu0 %1820
  %v1822 = vmul.f32 %v1818, %v789
  %v1823 = vmul.f32 %v1821, %v789
  %v1824 = vadd.f32 %v1822, 1e-05
  %v1825 = vadd.f32 %v1823, 1e-05
  %v1826 = vrsqrt.pop %v1824
  %v1827 = vrsqrt.pop %v1825
  %v1828 = vmul.f32 %v1812, %v1826
  %v1829 = vmul.f32 %v1813, %v1827
  %v1830 = vlaneseq
  %v1831 = vshrl.u32 %v1830, 7
  %v1832 = vsub.s32 0, %v1831
  %v1833 = vrot.slane %v1802, %v1832
  %v1834 = vmul.f32 %v1828, %v1833
  %v1835 = vmul.f32 %v1829, %v1833
  %v1836 = vlaneseq
  %v1837 = vshrl.u32 %v1836, 7
  %v1838 = vsub.s32 0, %v1837
  %v1839 = vrot.slane %v1803, %v1838
  %v1840 = vadd.f32 %v1834, %v1839
  %v1841 = vadd.f32 %v1835, %v1839
  %v1843 = vrot.slane %v1841, 7
  %v1845 = vsel %vm301, %v1840, %v1843
  %v1846 = vpack.c.bf16 %v1845, %v1845
  %v1847 = vld [vmem:[%s2 + $0x134] sm:$0xf]
  %v1848 = vld [vmem:[%s2 + $0x138] sm:$0xf]
  %v1849 = vld [vmem:[%s2 + $0x13c] sm:$0xf]
  %v1850 = vld [vmem:[%s2 + $0x140] sm:$0xf]
  %v1855 = vunpack.c.l.b16 %v1847
  %v1856 = vunpack.c.l.b16 %v1848
  %v1857 = vunpack.c.l.b16 %v1849
  %v1858 = vunpack.c.l.b16 %v1850
  %v1859 = vpack.c.b16 %v1856, %v1855
  %v1860 = vpack.c.b16 %v1858, %v1857
  %v1864 = vsel %vm330, %v1846, 0
  %1866 = vmatprep.subr.bf16.mxu0 0
  %1867 = vmatpush1.bf16.msra.mxu0 0
  %1868 = vmatprep.subr.bf16.mxu0 0
  %1869 = vmatpush1.bf16.msra.mxu0 0
  %1870 = vmatprep.subr.bf16.mxu0 0
  %1871 = vmatpush1.bf16.msra.mxu0 0
  %1872 = vmatprep.subr.bf16.mxu0 0
  %1873 = vmatpush1.bf16.msra.mxu0 0
  %1874 = vmatprep.subr.bf16.mxu0 0
  %1875 = vmatpush1.bf16.msra.mxu0 0
  %1876 = vmatprep.subr.bf16.mxu0 0
  %1877 = vmatpush1.bf16.msra.mxu0 0
  %1878 = vmatprep.subr.bf16.mxu0 0
  %1879 = vmatpush1.bf16.msra.mxu0 %v1860
  %1880 = vmatprep.subr.bf16.mxu0 0
  %1881 = vmatpush1.bf16.msra.mxu0 %v1859
  %1882 = vmatprep.subr.bf16.mxu0 0
  %1883 = vmatpush2.bf16.msra.mxu0 0
  %1884 = vmatprep.subr.bf16.mxu0 0
  %1885 = vmatpush2.bf16.msra.mxu0 0
  %1886 = vmatprep.subr.bf16.mxu0 0
  %1887 = vmatpush2.bf16.msra.mxu0 0
  %1888 = vmatprep.subr.bf16.mxu0 0
  %1889 = vmatpush2.bf16.msra.mxu0 0
  %1890 = vmatprep.subr.bf16.mxu0 0
  %1891 = vmatpush2.bf16.msra.mxu0 0
  %1892 = vmatprep.subr.bf16.mxu0 0
  %1893 = vmatpush2.bf16.msra.mxu0 0
  %1894 = vmatprep.subr.bf16.mxu0 0
  %1895 = vmatpush2.bf16.msra.mxu0 0
  %1896 = vmatprep.subr.bf16.mxu0 0
  %1897 = vmatpush2.bf16.msra.mxu0 0
  %1898 = vmatprep.mubr.bf16.mxu0 0
  %1899 = vmatmul.mubr.bf16.gmra.mxu0 %v1864
  %v1900 = vpop.f32.mrf.mxu0
  %v1901 = vadd.f32 0.0, %v1900
  %v1902 = vpop.f32.mrf.mxu0
  %v1903 = vpop.f32.mrf.mxu0
  %v1904 = vpop.f32.mrf.mxu0
  %1905 = vdwg.mxu0
  %v1906 = vld [vmem:[%s3 + $0x12] sm:$0x1]
  %v1907 = vlaneseq
  %v1908 = vshrl.u32 %v1907, 7
  %v1909 = vsub.s32 0, %v1908
  %v1910 = vrot.slane %v1906, %v1909
  %v1911 = vadd.f32 %v1901, %v1910
  %1913 = vrot.lane.b32.xlu0 %v1911, 96
  %v1914 = vpop.permute.xlu0 %1913
  %1915 = vrot.lane.b32.xlu0 %v1911, 64
  %v1916 = vpop.permute.xlu0 %1915
  %v1918 = vcombine.low %v1911, %v1916
  %v1920 = vunpack.c.l.s4 1983009808
  %v1921 = vunpack.c.0.s8 %v1920
  %v1922 = vlaneseq
  %v1923 = vshrl.u32 %v1922, 7
  %v1924 = vsub.s32 %v1921, %v1923
  %v1925 = vrot.slane %v1918, %v1924
  %v1927 = vcombine.low %v1925, %v1914
  %v1929 = vunpack.c.l.s4 1934713408
  %v1930 = vunpack.c.0.s8 %v1929
  %v1931 = vlaneseq
  %v1932 = vshrl.u32 %v1931, 7
  %v1933 = vsub.s32 %v1930, %v1932
  %v1934 = vrot.slane %v1927, %v1933
  %v1935 = vcombine.high %v1934, 0.0
  %v1936 = vld [vmem:[%s3 + $0x13] sm:$0x7]
  %v1937 = vld [vmem:[%s3 + $0x16] sm:$0x7]
  %vm1938 = vcmask 256000
  %v1939 = vsel %vm1938, %v1934, 0.0
  %1940 = vadd.xlane.f32.xlu0 %v1939
  %v1941 = vpop.xlane.xlu0 %1940
  %v1942 = vsel %vm1938, %v1935, 0.0
  %1943 = vadd.xlane.f32.xlu0 %v1942
  %v1944 = vpop.xlane.xlu0 %1943
  %v1945 = vmul.f32 %v1941, %v789
  %v1946 = vmul.f32 %v1944, %v789
  %v1947 = vsub.f32 %v1934, %v1945
  %v1948 = vsub.f32 %v1935, %v1946
  %v1949 = vmul.f32 %v1947, %v1947
  %v1950 = vmul.f32 %v1948, %v1948
  %v1951 = vsel %vm1938, %v1949, 0.0
  %1952 = vadd.xlane.f32.xlu0 %v1951
  %v1953 = vpop.xlane.xlu0 %1952
  %v1954 = vsel %vm1938, %v1950, 0.0
  %1955 = vadd.xlane.f32.xlu0 %v1954
  %v1956 = vpop.xlane.xlu0 %1955
  %v1957 = vmul.f32 %v1953, %v789
  %v1958 = vmul.f32 %v1956, %v789
  %v1959 = vadd.f32 %v1957, 1e-05
  %v1960 = vadd.f32 %v1958, 1e-05
  %v1961 = vrsqrt.pop %v1959
  %v1962 = vrsqrt.pop %v1960
  %v1963 = vmul.f32 %v1947, %v1961
  %v1964 = vmul.f32 %v1948, %v1962
  %v1965 = vmul.f32 %v1963, %v1936
  %v1966 = vmul.f32 %v1964, %v1936
  %v1967 = vadd.f32 %v1965, %v1937
  %v1968 = vadd.f32 %v1966, %v1937
  %v1969 = vmax.f32 %v1967, 0.0
  %v1971 = vunpack.c.l.s4 1983009808
  %v1972 = vunpack.c.0.s8 %v1971
  %v1973 = vlaneseq
  %v1974 = vshrl.u32 %v1973, 7
  %v1975 = vsub.s32 %v1972, %v1974
  %v1976 = vrot.slane %v1969, %v1975
  %v1977 = vmax.f32 %v1968, 0.0
  %v1979 = vunpack.c.l.s4 1983009808
  %v1980 = vunpack.c.0.s8 %v1979
  %v1981 = vlaneseq
  %v1982 = vshrl.u32 %v1981, 7
  %v1983 = vsub.s32 %v1980, %v1982
  %v1984 = vrot.slane %v1977, %v1983
  %v1985 = vcombine.low %v1976, %v1984
  %v1986 = vcombine.high %v1976, %v1984
  %v1988 = vunpack.c.l.s4 1934713408
  %v1989 = vunpack.c.0.s8 %v1988
  %v1990 = vlaneseq
  %v1991 = vshrl.u32 %v1990, 7
  %v1992 = vsub.s32 %v1989, %v1991
  %v1993 = vrot.slane %v1985, %v1992
  %v1994 = vcombine.high %v1993, 0.0
  %v1996 = vunpack.c.l.s4 1934713408
  %v1997 = vunpack.c.0.s8 %v1996
  %v1998 = vlaneseq
  %v1999 = vshrl.u32 %v1998, 7
  %v2000 = vsub.s32 %v1997, %v1999
  %v2001 = vrot.slane %v1986, %v2000
  %2003 = vrot.lane.b32.xlu0 %v1994, 32
  %v2004 = vpop.permute.xlu0 %2003
  %2007 = vrot.lane.b32.xlu0 %v2001, 64
  %v2008 = vpop.permute.xlu0 %2007
  %v2010 = vsel %vm330, %v1993, %v2004
  %v2011 = vsel %vm245, %v2010, %v2008
  %v2012 = vpack.c.bf16 %v2011, %v2011
  %v2013 = vld [vmem:[%s2 + $0x144] sm:$0xf]
  %v2014 = vld [vmem:[%s2 + $0x148] sm:$0xf]
  %v2015 = vld [vmem:[%s2 + $0x14c] sm:$0xf]
  %v2016 = vld [vmem:[%s2 + $0x150] sm:$0xf]
  %v2017 = vld [vmem:[%s2 + $0x154] sm:$0xf]
  %v2018 = vld [vmem:[%s2 + $0x158] sm:$0xf]
  %v2019 = vld [vmem:[%s2 + $0x15c] sm:$0xf]
  %v2020 = vld [vmem:[%s2 + $0x160] sm:$0xf]
  %v2021 = vld [vmem:[%s2 + $0x164] sm:$0xf]
  %v2022 = vld [vmem:[%s2 + $0x168] sm:$0xf]
  %v2023 = vld [vmem:[%s2 + $0x16c] sm:$0xf]
  %v2024 = vld [vmem:[%s2 + $0x170] sm:$0xf]
  %v2025 = vld [vmem:[%s3 + $0x19] sm:$0x1]
  %v2026 = vlaneseq
  %v2027 = vshrl.u32 %v2026, 7
  %v2028 = vsub.s32 0, %v2027
  %v2029 = vrot.slane %v2025, %v2028
  %v2042 = vunpack.c.l.b16 %v2013
  %v2043 = vunpack.c.l.b16 %v2014
  %v2044 = vunpack.c.l.b16 %v2015
  %v2045 = vunpack.c.l.b16 %v2016
  %v2046 = vunpack.c.l.b16 %v2017
  %v2047 = vunpack.c.l.b16 %v2018
  %v2048 = vunpack.c.l.b16 %v2019
  %v2049 = vunpack.c.l.b16 %v2020
  %v2050 = vunpack.c.l.b16 %v2021
  %v2051 = vunpack.c.l.b16 %v2022
  %v2052 = vunpack.c.l.b16 %v2023
  %v2053 = vunpack.c.l.b16 %v2024
  %v2054 = vpack.c.b16 %v2043, %v2042
  %v2055 = vpack.c.b16 %v2045, %v2044
  %v2056 = vpack.c.b16 %v2047, %v2046
  %v2057 = vpack.c.b16 %v2049, %v2048
  %v2058 = vpack.c.b16 %v2051, %v2050
  %v2059 = vpack.c.b16 %v2053, %v2052
  %vm2066 = vcmask 785408
  %v2068 = vsel %vm2066, %v2012, 0
  %2070 = vmatprep.subr.bf16.mxu0 0
  %2071 = vmatpush1.bf16.msra.mxu0 0
  %2072 = vmatprep.subr.bf16.mxu0 0
  %2073 = vmatpush1.bf16.msra.mxu0 0
  %2074 = vmatprep.subr.bf16.mxu0 0
  %2075 = vmatpush1.bf16.msra.mxu0 %v2059
  %2076 = vmatprep.subr.bf16.mxu0 0
  %2077 = vmatpush1.bf16.msra.mxu0 %v2058
  %2078 = vmatprep.subr.bf16.mxu0 0
  %2079 = vmatpush1.bf16.msra.mxu0 %v2057
  %2080 = vmatprep.subr.bf16.mxu0 0
  %2081 = vmatpush1.bf16.msra.mxu0 %v2056
  %2082 = vmatprep.subr.bf16.mxu0 0
  %2083 = vmatpush1.bf16.msra.mxu0 %v2055
  %2084 = vmatprep.subr.bf16.mxu0 0
  %2085 = vmatpush1.bf16.msra.mxu0 %v2054
  %2086 = vmatprep.subr.bf16.mxu0 0
  %2087 = vmatpush2.bf16.msra.mxu0 0
  %2088 = vmatprep.subr.bf16.mxu0 0
  %2089 = vmatpush2.bf16.msra.mxu0 0
  %2090 = vmatprep.subr.bf16.mxu0 0
  %2091 = vmatpush2.bf16.msra.mxu0 0
  %2092 = vmatprep.subr.bf16.mxu0 0
  %2093 = vmatpush2.bf16.msra.mxu0 0
  %2094 = vmatprep.subr.bf16.mxu0 0
  %2095 = vmatpush2.bf16.msra.mxu0 0
  %2096 = vmatprep.subr.bf16.mxu0 0
  %2097 = vmatpush2.bf16.msra.mxu0 0
  %2098 = vmatprep.subr.bf16.mxu0 0
  %2099 = vmatpush2.bf16.msra.mxu0 0
  %2100 = vmatprep.subr.bf16.mxu0 0
  %2101 = vmatpush2.bf16.msra.mxu0 0
  %2102 = vmatprep.mubr.bf16.mxu0 0
  %2103 = vmatmul.mubr.bf16.gmra.mxu0 %v2068
  %v2104 = vpop.f32.mrf.mxu0
  %v2105 = vadd.f32 %v2029, %v2104
  %v2106 = vpop.f32.mrf.mxu0
  %v2107 = vpop.f32.mrf.mxu0
  %v2108 = vpop.f32.mrf.mxu0
  %2109 = vdwg.mxu0
  %2110 = vst [vmem:[%s4] sm:$0x3] %v2105
  // Predicated region
  $region18: #{tour_classifier_forward.1} parent=0 // pred_check
    _
  $region19: #{tour_classifier_forward.1} parent=0 // pred_check_branch
    %2112 = sbr.rel (0) target = $region21
  $region20: #{tour_classifier_forward.1} parent=0 // pred_region
    _
  $region21: #{tour_classifier_forward.1} parent=0 // pred_fallthru
    _
  // Predicated region
  $region22: #{tour_classifier_forward.1} parent=0 // pred_check
    _
  $region23: #{tour_classifier_forward.1} parent=0 // pred_check_branch
    %2114 = sbr.rel (0) target = $region25
  $region24: #{tour_classifier_forward.1} parent=0 // pred_region
    _
  $region25: #{tour_classifier_forward.1} parent=0 // pred_fallthru
    _

</llo_original>
